<compile_context>
chip_gen: v6e
topology: v6e:2x2x1
jax: 0.10.0
libtpu: 0.0.40
codegen_flags: <defaults>
</compile_context>

<pallas_src>
import jax
import jax.numpy as jnp
from jax.experimental import pallas as pl
from jax.experimental.pallas import tpu as pltpu

IN_FEATS = 30           # model input features
IN_PAD = 32             # padded input features (full-array last dim is legal)
OUT_FEATS = 15 * 3      # 45 model output features
OUT_PAD = 64            # padded output features (full-array last dim is legal)
HIDDEN = 128            # demo hidden size (real model default is 1024 -- the
                        # same kernel works; vmem_limit_bytes is computed from
                        # the actual parameter sizes)
BN_EPS = 1e-5


def _round_up(x, m):
    return ((x + m - 1) // m) * m


# --------------------------------------------------------------------------
# Kernel
# --------------------------------------------------------------------------
def liftmodel_kernel(
    x_ref,
    w_in_ref, b_in_ref,
    w11_ref, t11_ref, w12_ref, t12_ref,
    w21_ref, t21_ref, w22_ref, t22_ref,
    w_fin_ref, b_fin_ref,
    o_ref,
):
    bf16 = jnp.bfloat16

    # input Linear(30->H): x is bf16 and zero-padded to 32 features; w_in has
    # zero rows for the padding, so the result is identical.
    h = jnp.dot(x_ref[...], w_in_ref[...],
                preferred_element_type=jnp.float32) + b_in_ref[...]

    def res_block(h, w1, t1, w2, t2):
        # (Linear -> folded-BN -> ReLU -> Dropout[eval=id]) x 2  + residual.
        out = jnp.maximum(
            jnp.dot(h.astype(bf16), w1, preferred_element_type=jnp.float32) + t1,
            0.0)
        out = jnp.maximum(
            jnp.dot(out.astype(bf16), w2, preferred_element_type=jnp.float32) + t2,
            0.0)
        return out + h

    h = res_block(h, w11_ref[...], t11_ref[...], w12_ref[...], t12_ref[...])
    h = res_block(h, w21_ref[...], t21_ref[...], w22_ref[...], t22_ref[...])

    # final Linear(H->45); columns 45..63 are zero padding.
    out = jnp.dot(h.astype(bf16), w_fin_ref[...],
                  preferred_element_type=jnp.float32) + b_fin_ref[...]
    o_ref[...] = out.astype(o_ref.dtype)


# --------------------------------------------------------------------------
# Host-side parameter preparation (fold BN, pad feature dims, cast to bf16)
# --------------------------------------------------------------------------
def prepare_params(p):
    """Fold eval-mode BN into Linear weights; pad in/out dims; weights -> bf16."""
    hidden = p["w_in"].shape[1]

    def fold(w, b, s, t):
        # (h @ w + b) * s + t == h @ (w*s) + (b*s + t);  s, t are (1, H).
        w_f = (w.astype(jnp.float32) * s).astype(jnp.bfloat16)
        b_f = (b.astype(jnp.float32) * s + t).astype(jnp.float32)
        return w_f, b_f

    w_in = (jnp.zeros((IN_PAD, hidden), jnp.float32)
            .at[:IN_FEATS, :].set(p["w_in"])).astype(jnp.bfloat16)
    fused = [w_in, p["b_in"].astype(jnp.float32)]
    for blk in ("1", "2"):
        w1, t1 = fold(p[f"w{blk}1"], p[f"b{blk}1"], p[f"s{blk}1"], p[f"t{blk}1"])
        w2, t2 = fold(p[f"w{blk}2"], p[f"b{blk}2"], p[f"s{blk}2"], p[f"t{blk}2"])
        fused += [w1, t1, w2, t2]
    w_fin = (jnp.zeros((hidden, OUT_PAD), jnp.float32)
             .at[:, :OUT_FEATS].set(p["w_fin"])).astype(jnp.bfloat16)
    b_fin = jnp.zeros((1, OUT_PAD), jnp.float32).at[:, :OUT_FEATS].set(p["b_fin"])
    fused += [w_fin, b_fin]
    return fused


# --------------------------------------------------------------------------
# Wrapper
# --------------------------------------------------------------------------
def lift_model_forward(x, params, *, batch_tile=512):
    """x: (B, 30) float32.  params: raw dict (unfolded, unpadded)."""
    B = x.shape[0]
    hidden = params["w_in"].shape[1]

    # Batch tile: multiple of 8 (sublane); clamp so grid >= 2 when B allows it
    # (v7x megacore: the batch axis is the only "parallel" grid axis).
    half = _round_up(max(pl.cdiv(B, 2), 8), 8)
    tile = max(8, min(_round_up(batch_tile, 8), half))
    B_pad = pl.cdiv(B, tile) * tile

    # Pad batch to a tile multiple, features 30 -> 32, carry x as bf16.
    x_p = (jnp.zeros((B_pad, IN_PAD), jnp.float32)
           .at[:B, :IN_FEATS].set(x)).astype(jnp.bfloat16)

    fused = prepare_params(params)

    # Every parameter is a full-array block, VMEM-resident for all grid steps.
    # Constant index_map -> single-buffer (no point double-buffering).
    def full_spec(arr):
        nd = arr.ndim
        idx = lambda i, _nd=nd: (0,) * _nd
        try:
            return pl.BlockSpec(arr.shape, idx, pipeline_mode=pl.Buffered(1))
        except (TypeError, AttributeError):
            return pl.BlockSpec(arr.shape, idx)

    grid_spec = pltpu.PrefetchScalarGridSpec(
        num_scalar_prefetch=0,
        grid=(B_pad // tile,),
        in_specs=[pl.BlockSpec((tile, IN_PAD), lambda i: (i, 0))]
        + [full_spec(p) for p in fused],
        out_specs=pl.BlockSpec((tile, OUT_PAD), lambda i: (i, 0)),
    )

    # Explicit VMEM budget: fused params (single-buffered) + double-buffered
    # input/output tiles + ~3 f32 activation temporaries, with 50% headroom.
    param_bytes = sum(int(p.size) * p.dtype.itemsize for p in fused)
    io_bytes = 2 * tile * IN_PAD * 2 + 2 * tile * OUT_PAD * 4
    act_bytes = 3 * tile * hidden * 4
    vmem_limit = int(1.5 * (param_bytes + io_bytes + act_bytes))
    vmem_limit = min(max(vmem_limit, 4 << 20), 100 << 20)

    out = pl.pallas_call(
        liftmodel_kernel,
        out_shape=jax.ShapeDtypeStruct((B_pad, OUT_PAD), jnp.float32),
        grid_spec=grid_spec,
        compiler_params=pltpu.CompilerParams(
            dimension_semantics=("parallel",),
            vmem_limit_bytes=vmem_limit,
        ),
    )(x_p, *fused)

    # Strip batch / feature padding.  (Downstream code that can consume the
    # padded slab directly should do so and skip this extra HBM pass.)
    return out[:B, :OUT_FEATS]


# --------------------------------------------------------------------------
# Synthetic parameters + plain-JAX reference (eval-mode semantics)
# --------------------------------------------------------------------------
def init_params(key, hidden=HIDDEN):
    keys = jax.random.split(key, 32)
    ki = iter(keys)

    def linear(in_f, out_f):
        # PyTorch Linear stores W as (out, in); we keep (in, out) = W.T.
        bound = 1.0 / jnp.sqrt(in_f)
        w = jax.random.uniform(next(ki), (in_f, out_f), jnp.float32, -bound, bound)
        b = jax.random.uniform(next(ki), (1, out_f), jnp.float32, -bound, bound)
        return w, b

    def folded_bn(feat):
        gamma = 1.0 + 0.1 * jax.random.normal(next(ki), (1, feat), jnp.float32)
        beta = 0.1 * jax.random.normal(next(ki), (1, feat), jnp.float32)
        mean = 0.1 * jax.random.normal(next(ki), (1, feat), jnp.float32)
        var = jnp.abs(1.0 + 0.1 * jax.random.normal(next(ki), (1, feat), jnp.float32))
        scale = gamma / jnp.sqrt(var + BN_EPS)
        shift = beta - mean * scale
        return scale, shift

    p = {}
    p["w_in"], p["b_in"] = linear(IN_FEATS, hidden)
    for blk in ("1", "2"):
        p[f"w{blk}1"], p[f"b{blk}1"] = linear(hidden, hidden)
        p[f"s{blk}1"], p[f"t{blk}1"] = folded_bn(hidden)
        p[f"w{blk}2"], p[f"b{blk}2"] = linear(hidden, hidden)
        p[f"s{blk}2"], p[f"t{blk}2"] = folded_bn(hidden)
    p["w_fin"], p["b_fin"] = linear(hidden, OUT_FEATS)
    return p


def lift_model_ref(x, p):
    """Plain-JAX f32 reference of the same eval-mode forward (no fold/pad)."""
    h = x @ p["w_in"] + p["b_in"]
    for blk in ("1", "2"):
        res = h
        o = jnp.maximum((h @ p[f"w{blk}1"] + p[f"b{blk}1"]) * p[f"s{blk}1"] + p[f"t{blk}1"], 0.0)
        o = jnp.maximum((o @ p[f"w{blk}2"] + p[f"b{blk}2"]) * p[f"s{blk}2"] + p[f"t{blk}2"], 0.0)
        h = o + res
    return h @ p["w_fin"] + p["b_fin"]


if __name__ == "__main__":
    key = jax.random.PRNGKey(0)
    kx, kp = jax.random.split(key)

    # Non-tile-multiple batch exercises the padding path; batch_tile=256 gives
    # grid=4 on the parallel batch axis (shards across v7x's two TensorCores).
    B = 1000
    x = jax.random.normal(kx, (B, IN_FEATS), jnp.float32)
    params = init_params(kp)

    out = lift_model_forward(x, params, batch_tile=256)
    out = jax.block_until_ready(out)

    ref = lift_model_ref(x, params)
    assert out.shape == (B, OUT_FEATS)
    # bf16 matmul operands -> loosened tolerance vs the pure-f32 reference.
    assert jnp.allclose(out, ref, atol=1e-1, rtol=5e-2)

    print("KERNEL_OK")
</pallas_src>

<mosaic_0001>
module attributes {stable_mosaic.version = 11 : i64} {
  func.func @liftmodel_kernel(%arg0: i32, %arg1: memref<256x32xbf16, #tpu.memory_space<vmem>>, %arg2: memref<32x128xbf16, #tpu.memory_space<vmem>>, %arg3: memref<1x128xf32, #tpu.memory_space<vmem>>, %arg4: memref<128x128xbf16, #tpu.memory_space<vmem>>, %arg5: memref<1x128xf32, #tpu.memory_space<vmem>>, %arg6: memref<128x128xbf16, #tpu.memory_space<vmem>>, %arg7: memref<1x128xf32, #tpu.memory_space<vmem>>, %arg8: memref<128x128xbf16, #tpu.memory_space<vmem>>, %arg9: memref<1x128xf32, #tpu.memory_space<vmem>>, %arg10: memref<128x128xbf16, #tpu.memory_space<vmem>>, %arg11: memref<1x128xf32, #tpu.memory_space<vmem>>, %arg12: memref<128x64xbf16, #tpu.memory_space<vmem>>, %arg13: memref<1x64xf32, #tpu.memory_space<vmem>>, %arg14: memref<256x64xf32, #tpu.memory_space<vmem>>) attributes {dimension_semantics = [#tpu.dimension_semantics<parallel>], iteration_bounds = array<i64: 4>, scalar_prefetch = 0 : i64, scratch_operands = 0 : i64, tpu.core_type = #tpu.core_type<tc>, window_params = [{transform_indices = @transform_0, window_bounds = array<i64: 256, 32>}, {pipeline_mode = #tpu.pipeline_mode<synchronous>, transform_indices = @transform_1, window_bounds = array<i64: 32, 128>}, {pipeline_mode = #tpu.pipeline_mode<synchronous>, transform_indices = @transform_2, window_bounds = array<i64: 1, 128>}, {pipeline_mode = #tpu.pipeline_mode<synchronous>, transform_indices = @transform_3, window_bounds = array<i64: 128, 128>}, {pipeline_mode = #tpu.pipeline_mode<synchronous>, transform_indices = @transform_4, window_bounds = array<i64: 1, 128>}, {pipeline_mode = #tpu.pipeline_mode<synchronous>, transform_indices = @transform_5, window_bounds = array<i64: 128, 128>}, {pipeline_mode = #tpu.pipeline_mode<synchronous>, transform_indices = @transform_6, window_bounds = array<i64: 1, 128>}, {pipeline_mode = #tpu.pipeline_mode<synchronous>, transform_indices = @transform_7, window_bounds = array<i64: 128, 128>}, {pipeline_mode = #tpu.pipeline_mode<synchronous>, transform_indices = @transform_8, window_bounds = array<i64: 1, 128>}, {pipeline_mode = #tpu.pipeline_mode<synchronous>, transform_indices = @transform_9, window_bounds = array<i64: 128, 128>}, {pipeline_mode = #tpu.pipeline_mode<synchronous>, transform_indices = @transform_10, window_bounds = array<i64: 1, 128>}, {pipeline_mode = #tpu.pipeline_mode<synchronous>, transform_indices = @transform_11, window_bounds = array<i64: 128, 64>}, {pipeline_mode = #tpu.pipeline_mode<synchronous>, transform_indices = @transform_12, window_bounds = array<i64: 1, 64>}, {transform_indices = @transform_13, window_bounds = array<i64: 256, 64>}]} {
    %c0 = arith.constant 0 : index
    %c0_0 = arith.constant 0 : index
    %0 = vector.load %arg1[%c0, %c0_0] : memref<256x32xbf16, #tpu.memory_space<vmem>>, vector<256x32xbf16>
    %c0_1 = arith.constant 0 : index
    %c0_2 = arith.constant 0 : index
    %1 = vector.load %arg2[%c0_1, %c0_2] : memref<32x128xbf16, #tpu.memory_space<vmem>>, vector<32x128xbf16>
    %cst = arith.constant dense<0.000000e+00> : vector<256x128xf32>
    %2 = tpu.matmul %0, %1, %cst {dimension_numbers = #tpu.dot_dimension_numbers<[1], [0], [0], [1], [0, 0, 1, 1], [], []>} : vector<256x32xbf16>, vector<32x128xbf16>, vector<256x128xf32> -> vector<256x128xf32>
    %c0_3 = arith.constant 0 : index
    %c0_4 = arith.constant 0 : index
    %3 = vector.load %arg3[%c0_3, %c0_4] : memref<1x128xf32, #tpu.memory_space<vmem>>, vector<1x128xf32>
    %4 = vector.broadcast %3 : vector<1x128xf32> to vector<256x128xf32>
    %5 = arith.addf %2, %4 : vector<256x128xf32>
    %c0_5 = arith.constant 0 : index
    %c0_6 = arith.constant 0 : index
    %6 = vector.load %arg4[%c0_5, %c0_6] : memref<128x128xbf16, #tpu.memory_space<vmem>>, vector<128x128xbf16>
    %c0_7 = arith.constant 0 : index
    %c0_8 = arith.constant 0 : index
    %7 = vector.load %arg5[%c0_7, %c0_8] : memref<1x128xf32, #tpu.memory_space<vmem>>, vector<1x128xf32>
    %c0_9 = arith.constant 0 : index
    %c0_10 = arith.constant 0 : index
    %8 = vector.load %arg6[%c0_9, %c0_10] : memref<128x128xbf16, #tpu.memory_space<vmem>>, vector<128x128xbf16>
    %c0_11 = arith.constant 0 : index
    %c0_12 = arith.constant 0 : index
    %9 = vector.load %arg7[%c0_11, %c0_12] : memref<1x128xf32, #tpu.memory_space<vmem>>, vector<1x128xf32>
    %10 = arith.truncf %5 : vector<256x128xf32> to vector<256x128xbf16>
    %cst_13 = arith.constant dense<0.000000e+00> : vector<256x128xf32>
    %11 = tpu.matmul %10, %6, %cst_13 {dimension_numbers = #tpu.dot_dimension_numbers<[1], [0], [0], [1], [0, 0, 1, 1], [], []>} : vector<256x128xbf16>, vector<128x128xbf16>, vector<256x128xf32> -> vector<256x128xf32>
    %12 = vector.broadcast %7 : vector<1x128xf32> to vector<256x128xf32>
    %13 = arith.addf %11, %12 : vector<256x128xf32>
    %cst_14 = arith.constant 0.000000e+00 : f32
    %14 = vector.broadcast %cst_14 : f32 to vector<256x128xf32>
    %15 = arith.maximumf %13, %14 : vector<256x128xf32>
    %16 = arith.truncf %15 : vector<256x128xf32> to vector<256x128xbf16>
    %cst_15 = arith.constant dense<0.000000e+00> : vector<256x128xf32>
    %17 = tpu.matmul %16, %8, %cst_15 {dimension_numbers = #tpu.dot_dimension_numbers<[1], [0], [0], [1], [0, 0, 1, 1], [], []>} : vector<256x128xbf16>, vector<128x128xbf16>, vector<256x128xf32> -> vector<256x128xf32>
    %18 = vector.broadcast %9 : vector<1x128xf32> to vector<256x128xf32>
    %19 = arith.addf %17, %18 : vector<256x128xf32>
    %cst_16 = arith.constant 0.000000e+00 : f32
    %20 = vector.broadcast %cst_16 : f32 to vector<256x128xf32>
    %21 = arith.maximumf %19, %20 : vector<256x128xf32>
    %22 = arith.addf %21, %5 : vector<256x128xf32>
    %c0_17 = arith.constant 0 : index
    %c0_18 = arith.constant 0 : index
    %23 = vector.load %arg8[%c0_17, %c0_18] : memref<128x128xbf16, #tpu.memory_space<vmem>>, vector<128x128xbf16>
    %c0_19 = arith.constant 0 : index
    %c0_20 = arith.constant 0 : index
    %24 = vector.load %arg9[%c0_19, %c0_20] : memref<1x128xf32, #tpu.memory_space<vmem>>, vector<1x128xf32>
    %c0_21 = arith.constant 0 : index
    %c0_22 = arith.constant 0 : index
    %25 = vector.load %arg10[%c0_21, %c0_22] : memref<128x128xbf16, #tpu.memory_space<vmem>>, vector<128x128xbf16>
    %c0_23 = arith.constant 0 : index
    %c0_24 = arith.constant 0 : index
    %26 = vector.load %arg11[%c0_23, %c0_24] : memref<1x128xf32, #tpu.memory_space<vmem>>, vector<1x128xf32>
    %27 = arith.truncf %22 : vector<256x128xf32> to vector<256x128xbf16>
    %cst_25 = arith.constant dense<0.000000e+00> : vector<256x128xf32>
    %28 = tpu.matmul %27, %23, %cst_25 {dimension_numbers = #tpu.dot_dimension_numbers<[1], [0], [0], [1], [0, 0, 1, 1], [], []>} : vector<256x128xbf16>, vector<128x128xbf16>, vector<256x128xf32> -> vector<256x128xf32>
    %29 = vector.broadcast %24 : vector<1x128xf32> to vector<256x128xf32>
    %30 = arith.addf %28, %29 : vector<256x128xf32>
    %cst_26 = arith.constant 0.000000e+00 : f32
    %31 = vector.broadcast %cst_26 : f32 to vector<256x128xf32>
    %32 = arith.maximumf %30, %31 : vector<256x128xf32>
    %33 = arith.truncf %32 : vector<256x128xf32> to vector<256x128xbf16>
    %cst_27 = arith.constant dense<0.000000e+00> : vector<256x128xf32>
    %34 = tpu.matmul %33, %25, %cst_27 {dimension_numbers = #tpu.dot_dimension_numbers<[1], [0], [0], [1], [0, 0, 1, 1], [], []>} : vector<256x128xbf16>, vector<128x128xbf16>, vector<256x128xf32> -> vector<256x128xf32>
    %35 = vector.broadcast %26 : vector<1x128xf32> to vector<256x128xf32>
    %36 = arith.addf %34, %35 : vector<256x128xf32>
    %cst_28 = arith.constant 0.000000e+00 : f32
    %37 = vector.broadcast %cst_28 : f32 to vector<256x128xf32>
    %38 = arith.maximumf %36, %37 : vector<256x128xf32>
    %39 = arith.addf %38, %22 : vector<256x128xf32>
    %40 = arith.truncf %39 : vector<256x128xf32> to vector<256x128xbf16>
    %c0_29 = arith.constant 0 : index
    %c0_30 = arith.constant 0 : index
    %41 = vector.load %arg12[%c0_29, %c0_30] : memref<128x64xbf16, #tpu.memory_space<vmem>>, vector<128x64xbf16>
    %cst_31 = arith.constant dense<0.000000e+00> : vector<256x64xf32>
    %42 = tpu.matmul %40, %41, %cst_31 {dimension_numbers = #tpu.dot_dimension_numbers<[1], [0], [0], [1], [0, 0, 1, 1], [], []>} : vector<256x128xbf16>, vector<128x64xbf16>, vector<256x64xf32> -> vector<256x64xf32>
    %c0_32 = arith.constant 0 : index
    %c0_33 = arith.constant 0 : index
    %43 = vector.load %arg13[%c0_32, %c0_33] : memref<1x64xf32, #tpu.memory_space<vmem>>, vector<1x64xf32>
    %44 = vector.broadcast %43 : vector<1x64xf32> to vector<256x64xf32>
    %45 = arith.addf %42, %44 : vector<256x64xf32>
    %c0_34 = arith.constant 0 : index
    %c0_35 = arith.constant 0 : index
    %46 = vector.load %arg14[%c0_34, %c0_35] : memref<256x64xf32, #tpu.memory_space<vmem>>, vector<256x64xf32>
    tpu.vector_store %arg14[%c0_34, %c0_35], %45 {strides = array<i32>} : memref<256x64xf32, #tpu.memory_space<vmem>>, vector<256x64xf32>,
    return
  }
  func.func @transform_0(%arg0: i32) -> (i32, i32) {
    %c0_i32 = arith.constant 0 : i32
    %c0_i32_0 = arith.constant 0 : i32
    return %arg0, %c0_i32 : i32, i32
  }
  func.func @transform_1(%arg0: i32) -> (i32, i32) {
    %c0_i32 = arith.constant 0 : i32
    %c0_i32_0 = arith.constant 0 : i32
    %c0_i32_1 = arith.constant 0 : i32
    return %c0_i32, %c0_i32_0 : i32, i32
  }
  func.func @transform_2(%arg0: i32) -> (i32, i32) {
    %c0_i32 = arith.constant 0 : i32
    %c0_i32_0 = arith.constant 0 : i32
    %c0_i32_1 = arith.constant 0 : i32
    return %c0_i32, %c0_i32_0 : i32, i32
  }
  func.func @transform_3(%arg0: i32) -> (i32, i32) {
    %c0_i32 = arith.constant 0 : i32
    %c0_i32_0 = arith.constant 0 : i32
    %c0_i32_1 = arith.constant 0 : i32
    return %c0_i32, %c0_i32_0 : i32, i32
  }
  func.func @transform_4(%arg0: i32) -> (i32, i32) {
    %c0_i32 = arith.constant 0 : i32
    %c0_i32_0 = arith.constant 0 : i32
    %c0_i32_1 = arith.constant 0 : i32
    return %c0_i32, %c0_i32_0 : i32, i32
  }
  func.func @transform_5(%arg0: i32) -> (i32, i32) {
    %c0_i32 = arith.constant 0 : i32
    %c0_i32_0 = arith.constant 0 : i32
    %c0_i32_1 = arith.constant 0 : i32
    return %c0_i32, %c0_i32_0 : i32, i32
  }
  func.func @transform_6(%arg0: i32) -> (i32, i32) {
    %c0_i32 = arith.constant 0 : i32
    %c0_i32_0 = arith.constant 0 : i32
    %c0_i32_1 = arith.constant 0 : i32
    return %c0_i32, %c0_i32_0 : i32, i32
  }
  func.func @transform_7(%arg0: i32) -> (i32, i32) {
    %c0_i32 = arith.constant 0 : i32
    %c0_i32_0 = arith.constant 0 : i32
    %c0_i32_1 = arith.constant 0 : i32
    return %c0_i32, %c0_i32_0 : i32, i32
  }
  func.func @transform_8(%arg0: i32) -> (i32, i32) {
    %c0_i32 = arith.constant 0 : i32
    %c0_i32_0 = arith.constant 0 : i32
    %c0_i32_1 = arith.constant 0 : i32
    return %c0_i32, %c0_i32_0 : i32, i32
  }
  func.func @transform_9(%arg0: i32) -> (i32, i32) {
    %c0_i32 = arith.constant 0 : i32
    %c0_i32_0 = arith.constant 0 : i32
    %c0_i32_1 = arith.constant 0 : i32
    return %c0_i32, %c0_i32_0 : i32, i32
  }
  func.func @transform_10(%arg0: i32) -> (i32, i32) {
    %c0_i32 = arith.constant 0 : i32
    %c0_i32_0 = arith.constant 0 : i32
    %c0_i32_1 = arith.constant 0 : i32
    return %c0_i32, %c0_i32_0 : i32, i32
  }
  func.func @transform_11(%arg0: i32) -> (i32, i32) {
    %c0_i32 = arith.constant 0 : i32
    %c0_i32_0 = arith.constant 0 : i32
    %c0_i32_1 = arith.constant 0 : i32
    return %c0_i32, %c0_i32_0 : i32, i32
  }
  func.func @transform_12(%arg0: i32) -> (i32, i32) {
    %c0_i32 = arith.constant 0 : i32
    %c0_i32_0 = arith.constant 0 : i32
    %c0_i32_1 = arith.constant 0 : i32
    return %c0_i32, %c0_i32_0 : i32, i32
  }
  func.func @transform_13(%arg0: i32) -> (i32, i32) {
    %c0_i32 = arith.constant 0 : i32
    %c0_i32_0 = arith.constant 0 : i32
    return %arg0, %c0_i32 : i32, i32
  }
}

</mosaic_0001>

<llo_original>
// kernel: tpu_custom_call.1
$region0: #{tpu_custom_call.1}
  #allocation0 [shape = 'u32[]', space=smem, size = 0x4, offset = 0x4, fixed_abs, tag = 'smem constant byte address 0x4 - core index']
  #allocation1 [shape = 'u32[144,128]{1,0:T(1,128)}', space=vmem, size = 0x12000, scoped, tag = 'internal scratch']
  %s0 = inlined_call_operand.vmem [shape: bf16[1024,32], index: 0, kind: input, shape index: {}]
  %s1 = inlined_call_operand.vmem [shape: bf16[32,128], index: 1, kind: input, shape index: {}]
  %s2 = inlined_call_operand.vmem [shape: f32[1,128], index: 2, kind: input, shape index: {}]
  %s3 = inlined_call_operand.vmem [shape: bf16[128,128], index: 3, kind: input, shape index: {}]
  %s4 = inlined_call_operand.vmem [shape: f32[1,128], index: 4, kind: input, shape index: {}]
  %s5 = inlined_call_operand.vmem [shape: bf16[128,128], index: 5, kind: input, shape index: {}]
  %s6 = inlined_call_operand.vmem [shape: f32[1,128], index: 6, kind: input, shape index: {}]
  %s7 = inlined_call_operand.vmem [shape: bf16[128,128], index: 7, kind: input, shape index: {}]
  %s8 = inlined_call_operand.vmem [shape: f32[1,128], index: 8, kind: input, shape index: {}]
  %s9 = inlined_call_operand.vmem [shape: bf16[128,128], index: 9, kind: input, shape index: {}]
  %s10 = inlined_call_operand.vmem [shape: f32[1,128], index: 10, kind: input, shape index: {}]
  %s11 = inlined_call_operand.vmem [shape: bf16[128,64], index: 11, kind: input, shape index: {}]
  %s12 = inlined_call_operand.vmem [shape: f32[1,64], index: 12, kind: input, shape index: {}]
  %s13 = inlined_call_operand.vmem [shape: f32[1024,64], index: 13, kind: output, shape index: {}]
  %s14 = sld [smem:[#allocation0]]
  $region85: #{tpu_custom_call.1} parent=0
    _
  %s16 = ssub.s32 1, %s14
  %s17 = scalar_select 0, %s16, %s14
  loop: start=0, step=1, limit=6
  $region2: #{tpu_custom_call.1} parent=0 // loop_pre_header
    _
  $region3: #{tpu_custom_call.1} parent=0 // loop_header
    %s19 = sphi 0, %s23
    %p20 = scmp.ge.s32.totalorder %s19, 6
    %s29 = sphi 0, %s31
    %s32 = sphi 0, %s29
    %s33 = sphi 0, %s32
    %s49 = sphi 0, %s33
    %s53 = sphi 0, %s53
    %s55 = sphi 0, %s53
    %s56 = sphi 0, %s55
    %s70 = sphi 0, %s56
    %s74 = sphi 0, %s74
    %s76 = sphi 0, %s74
    %s77 = sphi 0, %s76
    %s91 = sphi 0, %s77
    %s95 = sphi 0, %s95
    %s97 = sphi 0, %s95
    %s98 = sphi 0, %s97
    %s112 = sphi 0, %s98
    %s116 = sphi 0, %s116
    %s118 = sphi 0, %s116
    %s119 = sphi 0, %s118
    %s133 = sphi 0, %s119
    %s137 = sphi 0, %s137
    %s139 = sphi 0, %s137
    %s140 = sphi 0, %s139
    %s154 = sphi 0, %s140
    %s158 = sphi 0, %s158
    %s160 = sphi 0, %s158
    %s161 = sphi 0, %s160
    %s175 = sphi 0, %s161
    %s179 = sphi 0, %s179
    %s181 = sphi 0, %s179
    %s182 = sphi 0, %s181
    %s196 = sphi 0, %s182
    %s200 = sphi 0, %s200
    %s202 = sphi 0, %s200
    %s203 = sphi 0, %s202
    %s217 = sphi 0, %s203
    %s221 = sphi 0, %s221
    %s223 = sphi 0, %s221
    %s224 = sphi 0, %s223
    %s238 = sphi 0, %s224
    %s242 = sphi 0, %s242
    %s244 = sphi 0, %s242
    %s245 = sphi 0, %s244
    %s259 = sphi 0, %s245
    %s263 = sphi 0, %s263
    %s265 = sphi 0, %s263
    %s266 = sphi 0, %s265
    %s280 = sphi 0, %s266
    %s284 = sphi 0, %s284
    %s286 = sphi 0, %s284
    %s287 = sphi 0, %s286
    %s301 = sphi 0, %s287
    %s307 = sphi 0, %s309
    %s310 = sphi 0, %s307
    %s311 = sphi 0, %s310
    %s327 = sphi 0, %s311
  $region4: #{tpu_custom_call.1} parent=0 // loop_header_branch
    %22 = sbr.rel (%p20) target = $region8
  $region5: #{tpu_custom_call.1} parent=0 // loop_body
    %s24 = ssub.s32 %s19, 1
    %s25 = ssub.s32 %s19, 2
    %s26 = sadd.s32 %s19, 1
    %s27 = ssub.s32 %s19, %s26
    %p28 = scmp.eq.s32.totalorder %s27, 0
    %s30 = sadd.s32 %s29, 1
    %s31 = scalar_select %p28, %s29, %s30
    %p34 = pneg %p28
    %p35 = scmp.eq.s32.totalorder %s19, 3
    %p36 = por %p34, %p35
    %p37 = scmp.ne.s32.totalorder %s29, %s32
    %p38 = scmp.eq.s32.totalorder %s19, 0
    %p39 = por %p37, %p38
    %p40 = scmp.ne.s32.totalorder %s29, %s32
    %p41 = scmp.eq.s32.totalorder %s24, 3
    %p42 = por %p40, %p41
    %p43 = scmp.ne.s32.totalorder %s32, %s33
    %p44 = scmp.eq.s32.totalorder %s24, 0
    %p45 = por %p43, %p44
    %p46 = scmp.ne.s32.totalorder %s32, %s33
    %p47 = scmp.eq.s32.totalorder %s25, 3
    %p48 = por %p46, %p47
    %p50 = scmp.ne.s32.totalorder %s33, %s49
    %p51 = scmp.eq.s32.totalorder %s25, 0
    %p52 = por %p50, %p51
    %s54 = sadd.s32 %s53, 1
    %p57 = scmp.eq.s32.totalorder %s19, 3
    %p58 = scmp.ne.s32.totalorder %s53, %s55
    %p59 = scmp.eq.s32.totalorder %s19, 0
    %p60 = por %p58, %p59
    %p61 = scmp.ne.s32.totalorder %s53, %s55
    %p62 = scmp.eq.s32.totalorder %s24, 3
    %p63 = por %p61, %p62
    %p64 = scmp.ne.s32.totalorder %s55, %s56
    %p65 = scmp.eq.s32.totalorder %s24, 0
    %p66 = por %p64, %p65
    %p67 = scmp.ne.s32.totalorder %s55, %s56
    %p68 = scmp.eq.s32.totalorder %s25, 3
    %p69 = por %p67, %p68
    %p71 = scmp.ne.s32.totalorder %s56, %s70
    %p72 = scmp.eq.s32.totalorder %s25, 0
    %p73 = por %p71, %p72
    %s75 = sadd.s32 %s74, 1
    %p78 = scmp.eq.s32.totalorder %s19, 3
    %p79 = scmp.ne.s32.totalorder %s74, %s76
    %p80 = scmp.eq.s32.totalorder %s19, 0
    %p81 = por %p79, %p80
    %p82 = scmp.ne.s32.totalorder %s74, %s76
    %p83 = scmp.eq.s32.totalorder %s24, 3
    %p84 = por %p82, %p83
    %p85 = scmp.ne.s32.totalorder %s76, %s77
    %p86 = scmp.eq.s32.totalorder %s24, 0
    %p87 = por %p85, %p86
    %p88 = scmp.ne.s32.totalorder %s76, %s77
    %p89 = scmp.eq.s32.totalorder %s25, 3
    %p90 = por %p88, %p89
    %p92 = scmp.ne.s32.totalorder %s77, %s91
    %p93 = scmp.eq.s32.totalorder %s25, 0
    %p94 = por %p92, %p93
    %s96 = sadd.s32 %s95, 1
    %p99 = scmp.eq.s32.totalorder %s19, 3
    %p100 = scmp.ne.s32.totalorder %s95, %s97
    %p101 = scmp.eq.s32.totalorder %s19, 0
    %p102 = por %p100, %p101
    %p103 = scmp.ne.s32.totalorder %s95, %s97
    %p104 = scmp.eq.s32.totalorder %s24, 3
    %p105 = por %p103, %p104
    %p106 = scmp.ne.s32.totalorder %s97, %s98
    %p107 = scmp.eq.s32.totalorder %s24, 0
    %p108 = por %p106, %p107
    %p109 = scmp.ne.s32.totalorder %s97, %s98
    %p110 = scmp.eq.s32.totalorder %s25, 3
    %p111 = por %p109, %p110
    %p113 = scmp.ne.s32.totalorder %s98, %s112
    %p114 = scmp.eq.s32.totalorder %s25, 0
    %p115 = por %p113, %p114
    %s117 = sadd.s32 %s116, 1
    %p120 = scmp.eq.s32.totalorder %s19, 3
    %p121 = scmp.ne.s32.totalorder %s116, %s118
    %p122 = scmp.eq.s32.totalorder %s19, 0
    %p123 = por %p121, %p122
    %p124 = scmp.ne.s32.totalorder %s116, %s118
    %p125 = scmp.eq.s32.totalorder %s24, 3
    %p126 = por %p124, %p125
    %p127 = scmp.ne.s32.totalorder %s118, %s119
    %p128 = scmp.eq.s32.totalorder %s24, 0
    %p129 = por %p127, %p128
    %p130 = scmp.ne.s32.totalorder %s118, %s119
    %p131 = scmp.eq.s32.totalorder %s25, 3
    %p132 = por %p130, %p131
    %p134 = scmp.ne.s32.totalorder %s119, %s133
    %p135 = scmp.eq.s32.totalorder %s25, 0
    %p136 = por %p134, %p135
    %s138 = sadd.s32 %s137, 1
    %p141 = scmp.eq.s32.totalorder %s19, 3
    %p142 = scmp.ne.s32.totalorder %s137, %s139
    %p143 = scmp.eq.s32.totalorder %s19, 0
    %p144 = por %p142, %p143
    %p145 = scmp.ne.s32.totalorder %s137, %s139
    %p146 = scmp.eq.s32.totalorder %s24, 3
    %p147 = por %p145, %p146
    %p148 = scmp.ne.s32.totalorder %s139, %s140
    %p149 = scmp.eq.s32.totalorder %s24, 0
    %p150 = por %p148, %p149
    %p151 = scmp.ne.s32.totalorder %s139, %s140
    %p152 = scmp.eq.s32.totalorder %s25, 3
    %p153 = por %p151, %p152
    %p155 = scmp.ne.s32.totalorder %s140, %s154
    %p156 = scmp.eq.s32.totalorder %s25, 0
    %p157 = por %p155, %p156
    %s159 = sadd.s32 %s158, 1
    %p162 = scmp.eq.s32.totalorder %s19, 3
    %p163 = scmp.ne.s32.totalorder %s158, %s160
    %p164 = scmp.eq.s32.totalorder %s19, 0
    %p165 = por %p163, %p164
    %p166 = scmp.ne.s32.totalorder %s158, %s160
    %p167 = scmp.eq.s32.totalorder %s24, 3
    %p168 = por %p166, %p167
    %p169 = scmp.ne.s32.totalorder %s160, %s161
    %p170 = scmp.eq.s32.totalorder %s24, 0
    %p171 = por %p169, %p170
    %p172 = scmp.ne.s32.totalorder %s160, %s161
    %p173 = scmp.eq.s32.totalorder %s25, 3
    %p174 = por %p172, %p173
    %p176 = scmp.ne.s32.totalorder %s161, %s175
    %p177 = scmp.eq.s32.totalorder %s25, 0
    %p178 = por %p176, %p177
    %s180 = sadd.s32 %s179, 1
    %p183 = scmp.eq.s32.totalorder %s19, 3
    %p184 = scmp.ne.s32.totalorder %s179, %s181
    %p185 = scmp.eq.s32.totalorder %s19, 0
    %p186 = por %p184, %p185
    %p187 = scmp.ne.s32.totalorder %s179, %s181
    %p188 = scmp.eq.s32.totalorder %s24, 3
    %p189 = por %p187, %p188
    %p190 = scmp.ne.s32.totalorder %s181, %s182
    %p191 = scmp.eq.s32.totalorder %s24, 0
    %p192 = por %p190, %p191
    %p193 = scmp.ne.s32.totalorder %s181, %s182
    %p194 = scmp.eq.s32.totalorder %s25, 3
    %p195 = por %p193, %p194
    %p197 = scmp.ne.s32.totalorder %s182, %s196
    %p198 = scmp.eq.s32.totalorder %s25, 0
    %p199 = por %p197, %p198
    %s201 = sadd.s32 %s200, 1
    %p204 = scmp.eq.s32.totalorder %s19, 3
    %p205 = scmp.ne.s32.totalorder %s200, %s202
    %p206 = scmp.eq.s32.totalorder %s19, 0
    %p207 = por %p205, %p206
    %p208 = scmp.ne.s32.totalorder %s200, %s202
    %p209 = scmp.eq.s32.totalorder %s24, 3
    %p210 = por %p208, %p209
    %p211 = scmp.ne.s32.totalorder %s202, %s203
    %p212 = scmp.eq.s32.totalorder %s24, 0
    %p213 = por %p211, %p212
    %p214 = scmp.ne.s32.totalorder %s202, %s203
    %p215 = scmp.eq.s32.totalorder %s25, 3
    %p216 = por %p214, %p215
    %p218 = scmp.ne.s32.totalorder %s203, %s217
    %p219 = scmp.eq.s32.totalorder %s25, 0
    %p220 = por %p218, %p219
    %s222 = sadd.s32 %s221, 1
    %p225 = scmp.eq.s32.totalorder %s19, 3
    %p226 = scmp.ne.s32.totalorder %s221, %s223
    %p227 = scmp.eq.s32.totalorder %s19, 0
    %p228 = por %p226, %p227
    %p229 = scmp.ne.s32.totalorder %s221, %s223
    %p230 = scmp.eq.s32.totalorder %s24, 3
    %p231 = por %p229, %p230
    %p232 = scmp.ne.s32.totalorder %s223, %s224
    %p233 = scmp.eq.s32.totalorder %s24, 0
    %p234 = por %p232, %p233
    %p235 = scmp.ne.s32.totalorder %s223, %s224
    %p236 = scmp.eq.s32.totalorder %s25, 3
    %p237 = por %p235, %p236
    %p239 = scmp.ne.s32.totalorder %s224, %s238
    %p240 = scmp.eq.s32.totalorder %s25, 0
    %p241 = por %p239, %p240
    %s243 = sadd.s32 %s242, 1
    %p246 = scmp.eq.s32.totalorder %s19, 3
    %p247 = scmp.ne.s32.totalorder %s242, %s244
    %p248 = scmp.eq.s32.totalorder %s19, 0
    %p249 = por %p247, %p248
    %p250 = scmp.ne.s32.totalorder %s242, %s244
    %p251 = scmp.eq.s32.totalorder %s24, 3
    %p252 = por %p250, %p251
    %p253 = scmp.ne.s32.totalorder %s244, %s245
    %p254 = scmp.eq.s32.totalorder %s24, 0
    %p255 = por %p253, %p254
    %p256 = scmp.ne.s32.totalorder %s244, %s245
    %p257 = scmp.eq.s32.totalorder %s25, 3
    %p258 = por %p256, %p257
    %p260 = scmp.ne.s32.totalorder %s245, %s259
    %p261 = scmp.eq.s32.totalorder %s25, 0
    %p262 = por %p260, %p261
    %s264 = sadd.s32 %s263, 1
    %p267 = scmp.eq.s32.totalorder %s19, 3
    %p268 = scmp.ne.s32.totalorder %s263, %s265
    %p269 = scmp.eq.s32.totalorder %s19, 0
    %p270 = por %p268, %p269
    %p271 = scmp.ne.s32.totalorder %s263, %s265
    %p272 = scmp.eq.s32.totalorder %s24, 3
    %p273 = por %p271, %p272
    %p274 = scmp.ne.s32.totalorder %s265, %s266
    %p275 = scmp.eq.s32.totalorder %s24, 0
    %p276 = por %p274, %p275
    %p277 = scmp.ne.s32.totalorder %s265, %s266
    %p278 = scmp.eq.s32.totalorder %s25, 3
    %p279 = por %p277, %p278
    %p281 = scmp.ne.s32.totalorder %s266, %s280
    %p282 = scmp.eq.s32.totalorder %s25, 0
    %p283 = por %p281, %p282
    %s285 = sadd.s32 %s284, 1
    %p288 = scmp.eq.s32.totalorder %s19, 3
    %p289 = scmp.ne.s32.totalorder %s284, %s286
    %p290 = scmp.eq.s32.totalorder %s19, 0
    %p291 = por %p289, %p290
    %p292 = scmp.ne.s32.totalorder %s284, %s286
    %p293 = scmp.eq.s32.totalorder %s24, 3
    %p294 = por %p292, %p293
    %p295 = scmp.ne.s32.totalorder %s286, %s287
    %p296 = scmp.eq.s32.totalorder %s24, 0
    %p297 = por %p295, %p296
    %p298 = scmp.ne.s32.totalorder %s286, %s287
    %p299 = scmp.eq.s32.totalorder %s25, 3
    %p300 = por %p298, %p299
    %p302 = scmp.ne.s32.totalorder %s287, %s301
    %p303 = scmp.eq.s32.totalorder %s25, 0
    %p304 = por %p302, %p303
    %s305 = ssub.s32 %s19, %s26
    %p306 = scmp.eq.s32.totalorder %s305, 0
    %s308 = sadd.s32 %s307, 1
    %s309 = scalar_select %p306, %s307, %s308
    %p312 = pneg %p306
    %p313 = scmp.eq.s32.totalorder %s19, 3
    %p314 = por %p312, %p313
    %p315 = scmp.ne.s32.totalorder %s307, %s310
    %p316 = scmp.eq.s32.totalorder %s19, 0
    %p317 = por %p315, %p316
    %p318 = scmp.ne.s32.totalorder %s307, %s310
    %p319 = scmp.eq.s32.totalorder %s24, 3
    %p320 = por %p318, %p319
    %p321 = scmp.ne.s32.totalorder %s310, %s311
    %p322 = scmp.eq.s32.totalorder %s24, 0
    %p323 = por %p321, %p322
    %p324 = scmp.ne.s32.totalorder %s310, %s311
    %p325 = scmp.eq.s32.totalorder %s25, 3
    %p326 = por %p324, %p325
    %p328 = scmp.ne.s32.totalorder %s311, %s327
    %p329 = scmp.eq.s32.totalorder %s25, 0
    %p330 = por %p328, %p329
    %p331 = scmp.le.s32.totalorder 1, %s19
    %p332 = scmp.lt.s32.totalorder %s19, 5
    %p333 = pnand %p331, %p332
    %p334 = pneg %p333
    // Predicated region
    $region9: #{tpu_custom_call.1} parent=5 // pred_check
      _
    $region10: #{tpu_custom_call.1} parent=5 // pred_check_branch
      %336 = sbr.rel (%p333) target = $region12
    $region11: #{tpu_custom_call.1} parent=5 // pred_region
      %s337 = ssub.s32 %s19, 1
      // Predicated region
      $region13: #{tpu_custom_call.1} parent=11 // pred_check
        %p338 = pneg %p66
      $region14: #{tpu_custom_call.1} parent=11 // pred_check_branch
        %340 = sbr.rel (%p338) target = $region16
      $region15: #{tpu_custom_call.1} parent=11 // pred_region
        _
      $region16: #{tpu_custom_call.1} parent=11 // pred_fallthru
        _
      // Predicated region
      $region17: #{tpu_custom_call.1} parent=11 // pred_check
        %p341 = pneg %p87
      $region18: #{tpu_custom_call.1} parent=11 // pred_check_branch
        %343 = sbr.rel (%p341) target = $region20
      $region19: #{tpu_custom_call.1} parent=11 // pred_region
        _
      $region20: #{tpu_custom_call.1} parent=11 // pred_fallthru
        _
      // Predicated region
      $region21: #{tpu_custom_call.1} parent=11 // pred_check
        %p344 = pneg %p108
      $region22: #{tpu_custom_call.1} parent=11 // pred_check_branch
        %346 = sbr.rel (%p344) target = $region24
      $region23: #{tpu_custom_call.1} parent=11 // pred_region
        _
      $region24: #{tpu_custom_call.1} parent=11 // pred_fallthru
        _
      // Predicated region
      $region25: #{tpu_custom_call.1} parent=11 // pred_check
        %p347 = pneg %p129
      $region26: #{tpu_custom_call.1} parent=11 // pred_check_branch
        %349 = sbr.rel (%p347) target = $region28
      $region27: #{tpu_custom_call.1} parent=11 // pred_region
        _
      $region28: #{tpu_custom_call.1} parent=11 // pred_fallthru
        _
      // Predicated region
      $region29: #{tpu_custom_call.1} parent=11 // pred_check
        %p350 = pneg %p150
      $region30: #{tpu_custom_call.1} parent=11 // pred_check_branch
        %352 = sbr.rel (%p350) target = $region32
      $region31: #{tpu_custom_call.1} parent=11 // pred_region
        _
      $region32: #{tpu_custom_call.1} parent=11 // pred_fallthru
        _
      // Predicated region
      $region33: #{tpu_custom_call.1} parent=11 // pred_check
        %p353 = pneg %p171
      $region34: #{tpu_custom_call.1} parent=11 // pred_check_branch
        %355 = sbr.rel (%p353) target = $region36
      $region35: #{tpu_custom_call.1} parent=11 // pred_region
        _
      $region36: #{tpu_custom_call.1} parent=11 // pred_fallthru
        _
      // Predicated region
      $region37: #{tpu_custom_call.1} parent=11 // pred_check
        %p356 = pneg %p192
      $region38: #{tpu_custom_call.1} parent=11 // pred_check_branch
        %358 = sbr.rel (%p356) target = $region40
      $region39: #{tpu_custom_call.1} parent=11 // pred_region
        _
      $region40: #{tpu_custom_call.1} parent=11 // pred_fallthru
        _
      // Predicated region
      $region41: #{tpu_custom_call.1} parent=11 // pred_check
        %p359 = pneg %p213
      $region42: #{tpu_custom_call.1} parent=11 // pred_check_branch
        %361 = sbr.rel (%p359) target = $region44
      $region43: #{tpu_custom_call.1} parent=11 // pred_region
        _
      $region44: #{tpu_custom_call.1} parent=11 // pred_fallthru
        _
      // Predicated region
      $region45: #{tpu_custom_call.1} parent=11 // pred_check
        %p362 = pneg %p234
      $region46: #{tpu_custom_call.1} parent=11 // pred_check_branch
        %364 = sbr.rel (%p362) target = $region48
      $region47: #{tpu_custom_call.1} parent=11 // pred_region
        _
      $region48: #{tpu_custom_call.1} parent=11 // pred_fallthru
        _
      // Predicated region
      $region49: #{tpu_custom_call.1} parent=11 // pred_check
        %p365 = pneg %p255
      $region50: #{tpu_custom_call.1} parent=11 // pred_check_branch
        %367 = sbr.rel (%p365) target = $region52
      $region51: #{tpu_custom_call.1} parent=11 // pred_region
        _
      $region52: #{tpu_custom_call.1} parent=11 // pred_fallthru
        _
      // Predicated region
      $region53: #{tpu_custom_call.1} parent=11 // pred_check
        %p368 = pneg %p276
      $region54: #{tpu_custom_call.1} parent=11 // pred_check_branch
        %370 = sbr.rel (%p368) target = $region56
      $region55: #{tpu_custom_call.1} parent=11 // pred_region
        _
      $region56: #{tpu_custom_call.1} parent=11 // pred_fallthru
        _
      // Predicated region
      $region57: #{tpu_custom_call.1} parent=11 // pred_check
        %p371 = pneg %p297
      $region58: #{tpu_custom_call.1} parent=11 // pred_check_branch
        %373 = sbr.rel (%p371) target = $region60
      $region59: #{tpu_custom_call.1} parent=11 // pred_region
        _
      $region60: #{tpu_custom_call.1} parent=11 // pred_fallthru
        _
    $region12: #{tpu_custom_call.1} parent=5 // pred_fallthru
      _
    %p374 = scmp.lt.s32.totalorder %s19, 4
    // Predicated region
    $region61: #{tpu_custom_call.1} parent=5 // pred_check
      %p375 = pneg %p374
    $region62: #{tpu_custom_call.1} parent=5 // pred_check_branch
      %377 = sbr.rel (%p375) target = $region64
    $region63: #{tpu_custom_call.1} parent=5 // pred_region
      // Predicated region
      $region65: #{tpu_custom_call.1} parent=63 // pred_check
        %p378 = pneg %p39
      $region66: #{tpu_custom_call.1} parent=63 // pred_check_branch
        %380 = sbr.rel (%p378) target = $region68
      $region67: #{tpu_custom_call.1} parent=63 // pred_region
        %s381 = smul.u32 32, %s19
        %p382 = scmp.lt.s32.totalorder %s381, 127
        %s383 = scalar_select %p382, %s381, 127
        %s384 = smul.addr %s383, 4
        %s385 = scalar_lea.vmem %s0, %s384
        %s386 = smul.u32 32, %s19
      $region68: #{tpu_custom_call.1} parent=63 // pred_fallthru
        _
    $region64: #{tpu_custom_call.1} parent=5 // pred_fallthru
      _
    %p387 = scmp.le.s32.totalorder 1, %s19
    %p388 = scmp.lt.s32.totalorder %s19, 5
    %p389 = pnand %p387, %p388
    %p390 = pneg %p389
    // Predicated region
    $region69: #{tpu_custom_call.1} parent=5 // pred_check
      _
    $region70: #{tpu_custom_call.1} parent=5 // pred_check_branch
      %392 = sbr.rel (%p389) target = $region72
    $region71: #{tpu_custom_call.1} parent=5 // pred_region
      %s393 = ssub.s32 %s19, 1
      %s394 = smul.u32 32, %s24
      %p395 = scmp.lt.s32.totalorder %s394, 127
      %s396 = scalar_select %p395, %s394, 127
      %s397 = smul.addr %s396, 4
      %s398 = scalar_lea.vmem %s0, %s397
      %p399 = pneg %p45
      %p400 = pneg %p42
      %p401 = pneg %p66
      %p402 = pneg %p63
      %p403 = pneg %p87
      %p404 = pneg %p84
      %p405 = pneg %p108
      %p406 = pneg %p105
      %p407 = pneg %p129
      %p408 = pneg %p126
      %p409 = pneg %p150
      %p410 = pneg %p147
      %p411 = pneg %p171
      %p412 = pneg %p168
      %p413 = pneg %p192
      %p414 = pneg %p189
      %p415 = pneg %p213
      %p416 = pneg %p210
      %p417 = pneg %p234
      %p418 = pneg %p231
      %p419 = pneg %p255
      %p420 = pneg %p252
      %p421 = pneg %p276
      %p422 = pneg %p273
      %p423 = pneg %p297
      %p424 = pneg %p294
      %p425 = pneg %p323
      %p426 = pneg %p320
      %s427 = smul.u32 32, %s24
      %p428 = scmp.lt.s32.totalorder %s427, 127
      %s429 = scalar_select %p428, %s427, 127
      %s430 = smul.addr %s429, 8
      %s431 = scalar_lea.vmem %s13, %s430
      %s432 = smul.u32 32, %s24
      %p433 = scmp.lt.s32.totalorder %s432, 127
      %s434 = scalar_select %p433, %s432, 127
      %s435 = smul.addr %s434, 4
      %s436 = scalar_lea.vmem %s0, %s435
      %s437 = smul.u32 32, %s24
      %s438 = smul.u32 32, %s24
      %p439 = scmp.lt.s32.totalorder %s438, 127
      %s440 = scalar_select %p439, %s438, 127
      %s441 = smul.addr %s440, 8
      %s442 = scalar_lea.vmem %s13, %s441
      %s443 = smul.u32 32, %s24
      %v445 = vld [vmem:[%s436] sm:$0xf]
      %v446 = vld [vmem:[%s436 + $0x4] sm:$0xf]
      %v447 = vld [vmem:[%s436 + $0x8] sm:$0xf]
      %v448 = vld [vmem:[%s436 + $0xc] sm:$0xf]
      %v449 = vld [vmem:[%s436 + $0x10] sm:$0xf]
      %v450 = vld [vmem:[%s436 + $0x14] sm:$0xf]
      %v451 = vld [vmem:[%s436 + $0x18] sm:$0xf]
      %v452 = vld [vmem:[%s436 + $0x1c] sm:$0xf]
      %v453 = vld [vmem:[%s436 + $0x20] sm:$0xf]
      %v454 = vld [vmem:[%s436 + $0x24] sm:$0xf]
      %v455 = vld [vmem:[%s436 + $0x28] sm:$0xf]
      %v456 = vld [vmem:[%s436 + $0x2c] sm:$0xf]
      %v457 = vld [vmem:[%s436 + $0x30] sm:$0xf]
      %v458 = vld [vmem:[%s436 + $0x34] sm:$0xf]
      %v459 = vld [vmem:[%s436 + $0x38] sm:$0xf]
      %v460 = vld [vmem:[%s436 + $0x3c] sm:$0xf]
      %v461 = vld [vmem:[%s436 + $0x40] sm:$0xf]
      %v462 = vld [vmem:[%s436 + $0x44] sm:$0xf]
      %v463 = vld [vmem:[%s436 + $0x48] sm:$0xf]
      %v464 = vld [vmem:[%s436 + $0x4c] sm:$0xf]
      %v465 = vld [vmem:[%s436 + $0x50] sm:$0xf]
      %v466 = vld [vmem:[%s436 + $0x54] sm:$0xf]
      %v467 = vld [vmem:[%s436 + $0x58] sm:$0xf]
      %v468 = vld [vmem:[%s436 + $0x5c] sm:$0xf]
      %v469 = vld [vmem:[%s436 + $0x60] sm:$0xf]
      %v470 = vld [vmem:[%s436 + $0x64] sm:$0xf]
      %v471 = vld [vmem:[%s436 + $0x68] sm:$0xf]
      %v472 = vld [vmem:[%s436 + $0x6c] sm:$0xf]
      %v473 = vld [vmem:[%s436 + $0x70] sm:$0xf]
      %v474 = vld [vmem:[%s436 + $0x74] sm:$0xf]
      %v475 = vld [vmem:[%s436 + $0x78] sm:$0xf]
      %v476 = vld [vmem:[%s436 + $0x7c] sm:$0xf]
      %v477 = vld [vmem:[%s1] sm:$0xf]
      %v478 = vld [vmem:[%s1 + $0x4] sm:$0xf]
      %v479 = vld [vmem:[%s1 + $0x8] sm:$0xf]
      %v480 = vld [vmem:[%s1 + $0xc] sm:$0xf]
      %v481 = vld [vmem:[%s2] sm:$0x1]
      %v483 = vlaneseq
      %v484 = vshrl.u32 %v483, 7
      %v485 = vsub.s32 0, %v484
      %v486 = vrot.slane %v481, %v485
      %v520 = vunpack.c.l.b16 %v445
      %v521 = vunpack.c.l.b16 %v446
      %v522 = vunpack.c.l.b16 %v447
      %v523 = vunpack.c.l.b16 %v448
      %v524 = vunpack.c.l.b16 %v449
      %v525 = vunpack.c.l.b16 %v450
      %v526 = vunpack.c.l.b16 %v451
      %v527 = vunpack.c.l.b16 %v452
      %v528 = vunpack.c.l.b16 %v453
      %v529 = vunpack.c.l.b16 %v454
      %v530 = vunpack.c.l.b16 %v455
      %v531 = vunpack.c.l.b16 %v456
      %v532 = vunpack.c.l.b16 %v457
      %v533 = vunpack.c.l.b16 %v458
      %v534 = vunpack.c.l.b16 %v459
      %v535 = vunpack.c.l.b16 %v460
      %v536 = vunpack.c.l.b16 %v461
      %v537 = vunpack.c.l.b16 %v462
      %v538 = vunpack.c.l.b16 %v463
      %v539 = vunpack.c.l.b16 %v464
      %v540 = vunpack.c.l.b16 %v465
      %v541 = vunpack.c.l.b16 %v466
      %v542 = vunpack.c.l.b16 %v467
      %v543 = vunpack.c.l.b16 %v468
      %v544 = vunpack.c.l.b16 %v469
      %v545 = vunpack.c.l.b16 %v470
      %v546 = vunpack.c.l.b16 %v471
      %v547 = vunpack.c.l.b16 %v472
      %v548 = vunpack.c.l.b16 %v473
      %v549 = vunpack.c.l.b16 %v474
      %v550 = vunpack.c.l.b16 %v475
      %v551 = vunpack.c.l.b16 %v476
      %v552 = vpack.c.b16 %v521, %v520
      %v553 = vpack.c.b16 %v523, %v522
      %v554 = vpack.c.b16 %v525, %v524
      %v555 = vpack.c.b16 %v527, %v526
      %v556 = vpack.c.b16 %v529, %v528
      %v557 = vpack.c.b16 %v531, %v530
      %v558 = vpack.c.b16 %v533, %v532
      %v559 = vpack.c.b16 %v535, %v534
      %v560 = vpack.c.b16 %v537, %v536
      %v561 = vpack.c.b16 %v539, %v538
      %v562 = vpack.c.b16 %v541, %v540
      %v563 = vpack.c.b16 %v543, %v542
      %v564 = vpack.c.b16 %v545, %v544
      %v565 = vpack.c.b16 %v547, %v546
      %v566 = vpack.c.b16 %v549, %v548
      %v567 = vpack.c.b16 %v551, %v550
      %v572 = vunpack.c.l.b16 %v477
      %v573 = vunpack.c.l.b16 %v478
      %v574 = vunpack.c.l.b16 %v479
      %v575 = vunpack.c.l.b16 %v480
      %v576 = vpack.c.b16 %v573, %v572
      %v577 = vpack.c.b16 %v575, %v574
      %vm580 = vcmask 261120
      %v582 = vsel %vm580, %v552, 0
      %v585 = vsel %vm580, %v553, 0
      %v588 = vsel %vm580, %v554, 0
      %v591 = vsel %vm580, %v555, 0
      %v594 = vsel %vm580, %v556, 0
      %v597 = vsel %vm580, %v557, 0
      %v600 = vsel %vm580, %v558, 0
      %v603 = vsel %vm580, %v559, 0
      %v606 = vsel %vm580, %v560, 0
      %v609 = vsel %vm580, %v561, 0
      %v612 = vsel %vm580, %v562, 0
      %v615 = vsel %vm580, %v563, 0
      %v618 = vsel %vm580, %v564, 0
      %v621 = vsel %vm580, %v565, 0
      %v624 = vsel %vm580, %v566, 0
      %v627 = vsel %vm580, %v567, 0
      %629 = vmatprep.subr.bf16.mxu0 0
      %630 = vmatpush1.bf16.msra.mxu0 0
      %631 = vmatprep.subr.bf16.mxu0 0
      %632 = vmatpush1.bf16.msra.mxu0 0
      %633 = vmatprep.subr.bf16.mxu0 0
      %634 = vmatpush1.bf16.msra.mxu0 0
      %635 = vmatprep.subr.bf16.mxu0 0
      %636 = vmatpush1.bf16.msra.mxu0 0
      %637 = vmatprep.subr.bf16.mxu0 0
      %638 = vmatpush1.bf16.msra.mxu0 0
      %639 = vmatprep.subr.bf16.mxu0 0
      %640 = vmatpush1.bf16.msra.mxu0 0
      %641 = vmatprep.subr.bf16.mxu0 0
      %642 = vmatpush1.bf16.msra.mxu0 %v577
      %643 = vmatprep.subr.bf16.mxu0 0
      %644 = vmatpush1.bf16.msra.mxu0 %v576
      %645 = vmatprep.subr.bf16.mxu0 0
      %646 = vmatpush2.bf16.msra.mxu0 0
      %647 = vmatprep.subr.bf16.mxu0 0
      %648 = vmatpush2.bf16.msra.mxu0 0
      %649 = vmatprep.subr.bf16.mxu0 0
      %650 = vmatpush2.bf16.msra.mxu0 0
      %651 = vmatprep.subr.bf16.mxu0 0
      %652 = vmatpush2.bf16.msra.mxu0 0
      %653 = vmatprep.subr.bf16.mxu0 0
      %654 = vmatpush2.bf16.msra.mxu0 0
      %655 = vmatprep.subr.bf16.mxu0 0
      %656 = vmatpush2.bf16.msra.mxu0 0
      %657 = vmatprep.subr.bf16.mxu0 0
      %658 = vmatpush2.bf16.msra.mxu0 0
      %659 = vmatprep.subr.bf16.mxu0 0
      %660 = vmatpush2.bf16.msra.mxu0 0
      %661 = vmatprep.mubr.bf16.mxu0 0
      %662 = vmatmul.mubr.bf16.gmra.mxu0 %v582
      %v663 = vpop.f32.mrf.mxu0
      %v664 = vadd.f32 %v486, %v663
      %v665 = vpop.f32.mrf.mxu0
      %v666 = vpop.f32.mrf.mxu0
      %v667 = vadd.f32 %v486, %v666
      %v668 = vpop.f32.mrf.mxu0
      %669 = vmatprep.mubr.bf16.mxu0 0
      %670 = vmatmul.mubr.bf16.gmra.mxu0 %v585
      %v671 = vpop.f32.mrf.mxu0
      %v672 = vadd.f32 %v486, %v671
      %v673 = vpop.f32.mrf.mxu0
      %v674 = vpop.f32.mrf.mxu0
      %v675 = vadd.f32 %v486, %v674
      %v676 = vpop.f32.mrf.mxu0
      %677 = vmatprep.mubr.bf16.mxu0 0
      %678 = vmatmul.mubr.bf16.gmra.mxu0 %v588
      %v679 = vpop.f32.mrf.mxu0
      %v680 = vadd.f32 %v486, %v679
      %v681 = vpop.f32.mrf.mxu0
      %v682 = vpop.f32.mrf.mxu0
      %v683 = vadd.f32 %v486, %v682
      %v684 = vpop.f32.mrf.mxu0
      %685 = vmatprep.mubr.bf16.mxu0 0
      %686 = vmatmul.mubr.bf16.gmra.mxu0 %v591
      %v687 = vpop.f32.mrf.mxu0
      %v688 = vadd.f32 %v486, %v687
      %v689 = vpop.f32.mrf.mxu0
      %v690 = vpop.f32.mrf.mxu0
      %v691 = vadd.f32 %v486, %v690
      %v692 = vpop.f32.mrf.mxu0
      %693 = vmatprep.mubr.bf16.mxu0 0
      %694 = vmatmul.mubr.bf16.gmra.mxu0 %v594
      %v695 = vpop.f32.mrf.mxu0
      %v696 = vadd.f32 %v486, %v695
      %v697 = vpop.f32.mrf.mxu0
      %v698 = vpop.f32.mrf.mxu0
      %v699 = vadd.f32 %v486, %v698
      %v700 = vpop.f32.mrf.mxu0
      %701 = vmatprep.mubr.bf16.mxu0 0
      %702 = vmatmul.mubr.bf16.gmra.mxu0 %v597
      %v703 = vpop.f32.mrf.mxu0
      %v704 = vadd.f32 %v486, %v703
      %v705 = vpop.f32.mrf.mxu0
      %v706 = vpop.f32.mrf.mxu0
      %v707 = vadd.f32 %v486, %v706
      %v708 = vpop.f32.mrf.mxu0
      %709 = vmatprep.mubr.bf16.mxu0 0
      %710 = vmatmul.mubr.bf16.gmra.mxu0 %v600
      %v711 = vpop.f32.mrf.mxu0
      %v712 = vadd.f32 %v486, %v711
      %v713 = vpop.f32.mrf.mxu0
      %v714 = vpop.f32.mrf.mxu0
      %v715 = vadd.f32 %v486, %v714
      %v716 = vpop.f32.mrf.mxu0
      %717 = vmatprep.mubr.bf16.mxu0 0
      %718 = vmatmul.mubr.bf16.gmra.mxu0 %v603
      %v719 = vpop.f32.mrf.mxu0
      %v720 = vadd.f32 %v486, %v719
      %v721 = vpop.f32.mrf.mxu0
      %v722 = vpop.f32.mrf.mxu0
      %v723 = vadd.f32 %v486, %v722
      %v724 = vpop.f32.mrf.mxu0
      %725 = vmatprep.mubr.bf16.mxu0 0
      %726 = vmatmul.mubr.bf16.gmra.mxu0 %v606
      %v727 = vpop.f32.mrf.mxu0
      %v728 = vadd.f32 %v486, %v727
      %v729 = vpop.f32.mrf.mxu0
      %v730 = vpop.f32.mrf.mxu0
      %v731 = vadd.f32 %v486, %v730
      %v732 = vpop.f32.mrf.mxu0
      %733 = vmatprep.mubr.bf16.mxu0 0
      %734 = vmatmul.mubr.bf16.gmra.mxu0 %v609
      %v735 = vpop.f32.mrf.mxu0
      %v736 = vadd.f32 %v486, %v735
      %v737 = vpop.f32.mrf.mxu0
      %v738 = vpop.f32.mrf.mxu0
      %v739 = vadd.f32 %v486, %v738
      %v740 = vpop.f32.mrf.mxu0
      %741 = vmatprep.mubr.bf16.mxu0 0
      %742 = vmatmul.mubr.bf16.gmra.mxu0 %v612
      %v743 = vpop.f32.mrf.mxu0
      %v744 = vadd.f32 %v486, %v743
      %v745 = vpop.f32.mrf.mxu0
      %v746 = vpop.f32.mrf.mxu0
      %v747 = vadd.f32 %v486, %v746
      %v748 = vpop.f32.mrf.mxu0
      %749 = vmatprep.mubr.bf16.mxu0 0
      %750 = vmatmul.mubr.bf16.gmra.mxu0 %v615
      %v751 = vpop.f32.mrf.mxu0
      %v752 = vadd.f32 %v486, %v751
      %v753 = vpop.f32.mrf.mxu0
      %v754 = vpop.f32.mrf.mxu0
      %v755 = vadd.f32 %v486, %v754
      %v756 = vpop.f32.mrf.mxu0
      %757 = vmatprep.mubr.bf16.mxu0 0
      %758 = vmatmul.mubr.bf16.gmra.mxu0 %v618
      %v759 = vpop.f32.mrf.mxu0
      %v760 = vadd.f32 %v486, %v759
      %v761 = vpop.f32.mrf.mxu0
      %v762 = vpop.f32.mrf.mxu0
      %v763 = vadd.f32 %v486, %v762
      %v764 = vpop.f32.mrf.mxu0
      %765 = vmatprep.mubr.bf16.mxu0 0
      %766 = vmatmul.mubr.bf16.gmra.mxu0 %v621
      %v767 = vpop.f32.mrf.mxu0
      %v768 = vadd.f32 %v486, %v767
      %v769 = vpop.f32.mrf.mxu0
      %v770 = vpop.f32.mrf.mxu0
      %v771 = vadd.f32 %v486, %v770
      %v772 = vpop.f32.mrf.mxu0
      %773 = vmatprep.mubr.bf16.mxu0 0
      %774 = vmatmul.mubr.bf16.gmra.mxu0 %v624
      %v775 = vpop.f32.mrf.mxu0
      %v776 = vadd.f32 %v486, %v775
      %v777 = vpop.f32.mrf.mxu0
      %v778 = vpop.f32.mrf.mxu0
      %v779 = vadd.f32 %v486, %v778
      %v780 = vpop.f32.mrf.mxu0
      %781 = vmatprep.mubr.bf16.mxu0 0
      %782 = vmatmul.mubr.bf16.gmra.mxu0 %v627
      %v783 = vpop.f32.mrf.mxu0
      %v784 = vadd.f32 %v486, %v783
      %v785 = vpop.f32.mrf.mxu0
      %v786 = vpop.f32.mrf.mxu0
      %v787 = vadd.f32 %v486, %v786
      %v788 = vpop.f32.mrf.mxu0
      %789 = vdwg.mxu0
      %v790 = vld [vmem:[%s3] sm:$0xf]
      %v791 = vld [vmem:[%s3 + $0x4] sm:$0xf]
      %v792 = vld [vmem:[%s3 + $0x8] sm:$0xf]
      %v793 = vld [vmem:[%s3 + $0xc] sm:$0xf]
      %v794 = vld [vmem:[%s3 + $0x10] sm:$0xf]
      %v795 = vld [vmem:[%s3 + $0x14] sm:$0xf]
      %v796 = vld [vmem:[%s3 + $0x18] sm:$0xf]
      %v797 = vld [vmem:[%s3 + $0x1c] sm:$0xf]
      %v798 = vld [vmem:[%s3 + $0x20] sm:$0xf]
      %v799 = vld [vmem:[%s3 + $0x24] sm:$0xf]
      %v800 = vld [vmem:[%s3 + $0x28] sm:$0xf]
      %v801 = vld [vmem:[%s3 + $0x2c] sm:$0xf]
      %v802 = vld [vmem:[%s3 + $0x30] sm:$0xf]
      %v803 = vld [vmem:[%s3 + $0x34] sm:$0xf]
      %v804 = vld [vmem:[%s3 + $0x38] sm:$0xf]
      %v805 = vld [vmem:[%s3 + $0x3c] sm:$0xf]
      %v806 = vld [vmem:[%s4] sm:$0x1]
      %v807 = vld [vmem:[%s5] sm:$0xf]
      %v808 = vld [vmem:[%s5 + $0x4] sm:$0xf]
      %v809 = vld [vmem:[%s5 + $0x8] sm:$0xf]
      %v810 = vld [vmem:[%s5 + $0xc] sm:$0xf]
      %v811 = vld [vmem:[%s5 + $0x10] sm:$0xf]
      %v812 = vld [vmem:[%s5 + $0x14] sm:$0xf]
      %v813 = vld [vmem:[%s5 + $0x18] sm:$0xf]
      %v814 = vld [vmem:[%s5 + $0x1c] sm:$0xf]
      %v815 = vld [vmem:[%s5 + $0x20] sm:$0xf]
      %v816 = vld [vmem:[%s5 + $0x24] sm:$0xf]
      %v817 = vld [vmem:[%s5 + $0x28] sm:$0xf]
      %v818 = vld [vmem:[%s5 + $0x2c] sm:$0xf]
      %v819 = vld [vmem:[%s5 + $0x30] sm:$0xf]
      %v820 = vld [vmem:[%s5 + $0x34] sm:$0xf]
      %v821 = vld [vmem:[%s5 + $0x38] sm:$0xf]
      %v822 = vld [vmem:[%s5 + $0x3c] sm:$0xf]
      %v823 = vld [vmem:[%s6] sm:$0x1]
      %v824 = vpack.c.bf16 %v667, %v664
      %v825 = vpack.c.bf16 %v675, %v672
      %v826 = vpack.c.bf16 %v683, %v680
      %v827 = vpack.c.bf16 %v691, %v688
      %v828 = vpack.c.bf16 %v699, %v696
      %v829 = vpack.c.bf16 %v707, %v704
      %v830 = vpack.c.bf16 %v715, %v712
      %v831 = vpack.c.bf16 %v723, %v720
      %v832 = vpack.c.bf16 %v731, %v728
      %v833 = vpack.c.bf16 %v739, %v736
      %v834 = vpack.c.bf16 %v747, %v744
      %v835 = vpack.c.bf16 %v755, %v752
      %v836 = vpack.c.bf16 %v763, %v760
      %v837 = vpack.c.bf16 %v771, %v768
      %v838 = vpack.c.bf16 %v779, %v776
      %v839 = vpack.c.bf16 %v787, %v784
      %v841 = vlaneseq
      %v842 = vshrl.u32 %v841, 7
      %v843 = vsub.s32 0, %v842
      %v844 = vrot.slane %v806, %v843
      %v862 = vunpack.c.l.b16 %v790
      %v863 = vunpack.c.l.b16 %v791
      %v864 = vunpack.c.l.b16 %v792
      %v865 = vunpack.c.l.b16 %v793
      %v866 = vunpack.c.l.b16 %v794
      %v867 = vunpack.c.l.b16 %v795
      %v868 = vunpack.c.l.b16 %v796
      %v869 = vunpack.c.l.b16 %v797
      %v870 = vunpack.c.l.b16 %v798
      %v871 = vunpack.c.l.b16 %v799
      %v872 = vunpack.c.l.b16 %v800
      %v873 = vunpack.c.l.b16 %v801
      %v874 = vunpack.c.l.b16 %v802
      %v875 = vunpack.c.l.b16 %v803
      %v876 = vunpack.c.l.b16 %v804
      %v877 = vunpack.c.l.b16 %v805
      %v878 = vpack.c.b16 %v863, %v862
      %v879 = vpack.c.b16 %v865, %v864
      %v880 = vpack.c.b16 %v867, %v866
      %v881 = vpack.c.b16 %v869, %v868
      %v882 = vpack.c.b16 %v871, %v870
      %v883 = vpack.c.b16 %v873, %v872
      %v884 = vpack.c.b16 %v875, %v874
      %v885 = vpack.c.b16 %v877, %v876
      %894 = vmatprep.subr.bf16.mxu0 0
      %895 = vmatpush1.bf16.msra.mxu0 %v885
      %896 = vmatprep.subr.bf16.mxu0 0
      %897 = vmatpush1.bf16.msra.mxu0 %v884
      %898 = vmatprep.subr.bf16.mxu0 0
      %899 = vmatpush1.bf16.msra.mxu0 %v883
      %900 = vmatprep.subr.bf16.mxu0 0
      %901 = vmatpush1.bf16.msra.mxu0 %v882
      %902 = vmatprep.subr.bf16.mxu0 0
      %903 = vmatpush1.bf16.msra.mxu0 %v881
      %904 = vmatprep.subr.bf16.mxu0 0
      %905 = vmatpush1.bf16.msra.mxu0 %v880
      %906 = vmatprep.subr.bf16.mxu0 0
      %907 = vmatpush1.bf16.msra.mxu0 %v879
      %908 = vmatprep.subr.bf16.mxu0 0
      %909 = vmatpush1.bf16.msra.mxu0 %v878
      %910 = vmatprep.subr.bf16.mxu0 0
      %911 = vmatpush2.bf16.msra.mxu0 0
      %912 = vmatprep.subr.bf16.mxu0 0
      %913 = vmatpush2.bf16.msra.mxu0 0
      %914 = vmatprep.subr.bf16.mxu0 0
      %915 = vmatpush2.bf16.msra.mxu0 0
      %916 = vmatprep.subr.bf16.mxu0 0
      %917 = vmatpush2.bf16.msra.mxu0 0
      %918 = vmatprep.subr.bf16.mxu0 0
      %919 = vmatpush2.bf16.msra.mxu0 0
      %920 = vmatprep.subr.bf16.mxu0 0
      %921 = vmatpush2.bf16.msra.mxu0 0
      %922 = vmatprep.subr.bf16.mxu0 0
      %923 = vmatpush2.bf16.msra.mxu0 0
      %924 = vmatprep.subr.bf16.mxu0 0
      %925 = vmatpush2.bf16.msra.mxu0 0
      %926 = vmatprep.mubr.bf16.mxu0 0
      %927 = vmatmul.mubr.bf16.gmra.mxu0 %v824
      %v928 = vpop.f32.mrf.mxu0
      %v929 = vadd.f32 %v844, %v928
      %v930 = vpop.f32.mrf.mxu0
      %v931 = vpop.f32.mrf.mxu0
      %v932 = vadd.f32 %v844, %v931
      %v933 = vpop.f32.mrf.mxu0
      %934 = vmatprep.mubr.bf16.mxu0 0
      %935 = vmatmul.mubr.bf16.gmra.mxu0 %v825
      %v936 = vpop.f32.mrf.mxu0
      %v937 = vadd.f32 %v844, %v936
      %v938 = vpop.f32.mrf.mxu0
      %v939 = vpop.f32.mrf.mxu0
      %v940 = vadd.f32 %v844, %v939
      %v941 = vpop.f32.mrf.mxu0
      %942 = vmatprep.mubr.bf16.mxu0 0
      %943 = vmatmul.mubr.bf16.gmra.mxu0 %v826
      %v944 = vpop.f32.mrf.mxu0
      %v945 = vadd.f32 %v844, %v944
      %v946 = vpop.f32.mrf.mxu0
      %v947 = vpop.f32.mrf.mxu0
      %v948 = vadd.f32 %v844, %v947
      %v949 = vpop.f32.mrf.mxu0
      %950 = vmatprep.mubr.bf16.mxu0 0
      %951 = vmatmul.mubr.bf16.gmra.mxu0 %v827
      %v952 = vpop.f32.mrf.mxu0
      %v953 = vadd.f32 %v844, %v952
      %v954 = vpop.f32.mrf.mxu0
      %v955 = vpop.f32.mrf.mxu0
      %v956 = vadd.f32 %v844, %v955
      %v957 = vpop.f32.mrf.mxu0
      %958 = vmatprep.mubr.bf16.mxu0 0
      %959 = vmatmul.mubr.bf16.gmra.mxu0 %v828
      %v960 = vpop.f32.mrf.mxu0
      %v961 = vadd.f32 %v844, %v960
      %v962 = vpop.f32.mrf.mxu0
      %v963 = vpop.f32.mrf.mxu0
      %v964 = vadd.f32 %v844, %v963
      %v965 = vpop.f32.mrf.mxu0
      %966 = vmatprep.mubr.bf16.mxu0 0
      %967 = vmatmul.mubr.bf16.gmra.mxu0 %v829
      %v968 = vpop.f32.mrf.mxu0
      %v969 = vadd.f32 %v844, %v968
      %v970 = vpop.f32.mrf.mxu0
      %v971 = vpop.f32.mrf.mxu0
      %v972 = vadd.f32 %v844, %v971
      %v973 = vpop.f32.mrf.mxu0
      %974 = vmatprep.mubr.bf16.mxu0 0
      %975 = vmatmul.mubr.bf16.gmra.mxu0 %v830
      %v976 = vpop.f32.mrf.mxu0
      %v977 = vadd.f32 %v844, %v976
      %v978 = vpop.f32.mrf.mxu0
      %v979 = vpop.f32.mrf.mxu0
      %v980 = vadd.f32 %v844, %v979
      %v981 = vpop.f32.mrf.mxu0
      %982 = vmatprep.mubr.bf16.mxu0 0
      %983 = vmatmul.mubr.bf16.gmra.mxu0 %v831
      %v984 = vpop.f32.mrf.mxu0
      %v985 = vadd.f32 %v844, %v984
      %v986 = vpop.f32.mrf.mxu0
      %v987 = vpop.f32.mrf.mxu0
      %v988 = vadd.f32 %v844, %v987
      %v989 = vpop.f32.mrf.mxu0
      %990 = vmatprep.mubr.bf16.mxu0 0
      %991 = vmatmul.mubr.bf16.gmra.mxu0 %v832
      %v992 = vpop.f32.mrf.mxu0
      %v993 = vadd.f32 %v844, %v992
      %v994 = vpop.f32.mrf.mxu0
      %v995 = vpop.f32.mrf.mxu0
      %v996 = vadd.f32 %v844, %v995
      %v997 = vpop.f32.mrf.mxu0
      %998 = vmatprep.mubr.bf16.mxu0 0
      %999 = vmatmul.mubr.bf16.gmra.mxu0 %v833
      %v1000 = vpop.f32.mrf.mxu0
      %v1001 = vadd.f32 %v844, %v1000
      %v1002 = vpop.f32.mrf.mxu0
      %v1003 = vpop.f32.mrf.mxu0
      %v1004 = vadd.f32 %v844, %v1003
      %v1005 = vpop.f32.mrf.mxu0
      %1006 = vmatprep.mubr.bf16.mxu0 0
      %1007 = vmatmul.mubr.bf16.gmra.mxu0 %v834
      %v1008 = vpop.f32.mrf.mxu0
      %v1009 = vadd.f32 %v844, %v1008
      %v1010 = vpop.f32.mrf.mxu0
      %v1011 = vpop.f32.mrf.mxu0
      %v1012 = vadd.f32 %v844, %v1011
      %v1013 = vpop.f32.mrf.mxu0
      %1014 = vmatprep.mubr.bf16.mxu0 0
      %1015 = vmatmul.mubr.bf16.gmra.mxu0 %v835
      %v1016 = vpop.f32.mrf.mxu0
      %v1017 = vadd.f32 %v844, %v1016
      %v1018 = vpop.f32.mrf.mxu0
      %v1019 = vpop.f32.mrf.mxu0
      %v1020 = vadd.f32 %v844, %v1019
      %v1021 = vpop.f32.mrf.mxu0
      %1022 = vmatprep.mubr.bf16.mxu0 0
      %1023 = vmatmul.mubr.bf16.gmra.mxu0 %v836
      %v1024 = vpop.f32.mrf.mxu0
      %v1025 = vadd.f32 %v844, %v1024
      %v1026 = vpop.f32.mrf.mxu0
      %v1027 = vpop.f32.mrf.mxu0
      %v1028 = vadd.f32 %v844, %v1027
      %v1029 = vpop.f32.mrf.mxu0
      %1030 = vmatprep.mubr.bf16.mxu0 0
      %1031 = vmatmul.mubr.bf16.gmra.mxu0 %v837
      %v1032 = vpop.f32.mrf.mxu0
      %v1033 = vadd.f32 %v844, %v1032
      %v1034 = vpop.f32.mrf.mxu0
      %v1035 = vpop.f32.mrf.mxu0
      %v1036 = vadd.f32 %v844, %v1035
      %v1037 = vpop.f32.mrf.mxu0
      %1038 = vmatprep.mubr.bf16.mxu0 0
      %1039 = vmatmul.mubr.bf16.gmra.mxu0 %v838
      %v1040 = vpop.f32.mrf.mxu0
      %v1041 = vadd.f32 %v844, %v1040
      %v1042 = vpop.f32.mrf.mxu0
      %v1043 = vpop.f32.mrf.mxu0
      %v1044 = vadd.f32 %v844, %v1043
      %v1045 = vpop.f32.mrf.mxu0
      %1046 = vmatprep.mubr.bf16.mxu0 0
      %1047 = vmatmul.mubr.bf16.gmra.mxu0 %v839
      %v1048 = vpop.f32.mrf.mxu0
      %v1049 = vadd.f32 %v844, %v1048
      %v1050 = vpop.f32.mrf.mxu0
      %v1051 = vpop.f32.mrf.mxu0
      %v1052 = vadd.f32 %v844, %v1051
      %v1053 = vpop.f32.mrf.mxu0
      %1054 = vdwg.mxu0
      %v1055 = vmax.f32 %v929, 0.0
      %v1056 = vmax.f32 %v932, 0.0
      %v1057 = vmax.f32 %v937, 0.0
      %v1058 = vmax.f32 %v940, 0.0
      %v1059 = vmax.f32 %v945, 0.0
      %v1060 = vmax.f32 %v948, 0.0
      %v1061 = vmax.f32 %v953, 0.0
      %v1062 = vmax.f32 %v956, 0.0
      %v1063 = vmax.f32 %v961, 0.0
      %v1064 = vmax.f32 %v964, 0.0
      %v1065 = vmax.f32 %v969, 0.0
      %v1066 = vmax.f32 %v972, 0.0
      %v1067 = vmax.f32 %v977, 0.0
      %v1068 = vmax.f32 %v980, 0.0
      %v1069 = vmax.f32 %v985, 0.0
      %v1070 = vmax.f32 %v988, 0.0
      %v1071 = vmax.f32 %v993, 0.0
      %v1072 = vmax.f32 %v996, 0.0
      %v1073 = vmax.f32 %v1001, 0.0
      %v1074 = vmax.f32 %v1004, 0.0
      %v1075 = vmax.f32 %v1009, 0.0
      %v1076 = vmax.f32 %v1012, 0.0
      %v1077 = vmax.f32 %v1017, 0.0
      %v1078 = vmax.f32 %v1020, 0.0
      %v1079 = vmax.f32 %v1025, 0.0
      %v1080 = vmax.f32 %v1028, 0.0
      %v1081 = vmax.f32 %v1033, 0.0
      %v1082 = vmax.f32 %v1036, 0.0
      %v1083 = vmax.f32 %v1041, 0.0
      %v1084 = vmax.f32 %v1044, 0.0
      %v1085 = vmax.f32 %v1049, 0.0
      %v1086 = vmax.f32 %v1052, 0.0
      %v1087 = vpack.c.bf16 %v1056, %v1055
      %v1088 = vpack.c.bf16 %v1058, %v1057
      %v1089 = vpack.c.bf16 %v1060, %v1059
      %v1090 = vpack.c.bf16 %v1062, %v1061
      %v1091 = vpack.c.bf16 %v1064, %v1063
      %v1092 = vpack.c.bf16 %v1066, %v1065
      %v1093 = vpack.c.bf16 %v1068, %v1067
      %v1094 = vpack.c.bf16 %v1070, %v1069
      %v1095 = vpack.c.bf16 %v1072, %v1071
      %v1096 = vpack.c.bf16 %v1074, %v1073
      %v1097 = vpack.c.bf16 %v1076, %v1075
      %v1098 = vpack.c.bf16 %v1078, %v1077
      %v1099 = vpack.c.bf16 %v1080, %v1079
      %v1100 = vpack.c.bf16 %v1082, %v1081
      %v1101 = vpack.c.bf16 %v1084, %v1083
      %v1102 = vpack.c.bf16 %v1086, %v1085
      %v1104 = vlaneseq
      %v1105 = vshrl.u32 %v1104, 7
      %v1106 = vsub.s32 0, %v1105
      %v1107 = vrot.slane %v823, %v1106
      %v1125 = vunpack.c.l.b16 %v807
      %v1126 = vunpack.c.l.b16 %v808
      %v1127 = vunpack.c.l.b16 %v809
      %v1128 = vunpack.c.l.b16 %v810
      %v1129 = vunpack.c.l.b16 %v811
      %v1130 = vunpack.c.l.b16 %v812
      %v1131 = vunpack.c.l.b16 %v813
      %v1132 = vunpack.c.l.b16 %v814
      %v1133 = vunpack.c.l.b16 %v815
      %v1134 = vunpack.c.l.b16 %v816
      %v1135 = vunpack.c.l.b16 %v817
      %v1136 = vunpack.c.l.b16 %v818
      %v1137 = vunpack.c.l.b16 %v819
      %v1138 = vunpack.c.l.b16 %v820
      %v1139 = vunpack.c.l.b16 %v821
      %v1140 = vunpack.c.l.b16 %v822
      %v1141 = vpack.c.b16 %v1126, %v1125
      %v1142 = vpack.c.b16 %v1128, %v1127
      %v1143 = vpack.c.b16 %v1130, %v1129
      %v1144 = vpack.c.b16 %v1132, %v1131
      %v1145 = vpack.c.b16 %v1134, %v1133
      %v1146 = vpack.c.b16 %v1136, %v1135
      %v1147 = vpack.c.b16 %v1138, %v1137
      %v1148 = vpack.c.b16 %v1140, %v1139
      %1157 = vmatprep.subr.bf16.mxu0 0
      %1158 = vmatpush1.bf16.msra.mxu0 %v1148
      %1159 = vmatprep.subr.bf16.mxu0 0
      %1160 = vmatpush1.bf16.msra.mxu0 %v1147
      %1161 = vmatprep.subr.bf16.mxu0 0
      %1162 = vmatpush1.bf16.msra.mxu0 %v1146
      %1163 = vmatprep.subr.bf16.mxu0 0
      %1164 = vmatpush1.bf16.msra.mxu0 %v1145
      %1165 = vmatprep.subr.bf16.mxu0 0
      %1166 = vmatpush1.bf16.msra.mxu0 %v1144
      %1167 = vmatprep.subr.bf16.mxu0 0
      %1168 = vmatpush1.bf16.msra.mxu0 %v1143
      %1169 = vmatprep.subr.bf16.mxu0 0
      %1170 = vmatpush1.bf16.msra.mxu0 %v1142
      %1171 = vmatprep.subr.bf16.mxu0 0
      %1172 = vmatpush1.bf16.msra.mxu0 %v1141
      %1173 = vmatprep.subr.bf16.mxu0 0
      %1174 = vmatpush2.bf16.msra.mxu0 0
      %1175 = vmatprep.subr.bf16.mxu0 0
      %1176 = vmatpush2.bf16.msra.mxu0 0
      %1177 = vmatprep.subr.bf16.mxu0 0
      %1178 = vmatpush2.bf16.msra.mxu0 0
      %1179 = vmatprep.subr.bf16.mxu0 0
      %1180 = vmatpush2.bf16.msra.mxu0 0
      %1181 = vmatprep.subr.bf16.mxu0 0
      %1182 = vmatpush2.bf16.msra.mxu0 0
      %1183 = vmatprep.subr.bf16.mxu0 0
      %1184 = vmatpush2.bf16.msra.mxu0 0
      %1185 = vmatprep.subr.bf16.mxu0 0
      %1186 = vmatpush2.bf16.msra.mxu0 0
      %1187 = vmatprep.subr.bf16.mxu0 0
      %1188 = vmatpush2.bf16.msra.mxu0 0
      %1189 = vmatprep.mubr.bf16.mxu0 0
      %1190 = vmatmul.mubr.bf16.gmra.mxu0 %v1087
      %v1191 = vpop.f32.mrf.mxu0
      %v1192 = vadd.f32 %v1107, %v1191
      %v1193 = vpop.f32.mrf.mxu0
      %v1194 = vpop.f32.mrf.mxu0
      %v1195 = vadd.f32 %v1107, %v1194
      %v1196 = vpop.f32.mrf.mxu0
      %1197 = vmatprep.mubr.bf16.mxu0 0
      %1198 = vmatmul.mubr.bf16.gmra.mxu0 %v1088
      %v1199 = vpop.f32.mrf.mxu0
      %v1200 = vadd.f32 %v1107, %v1199
      %v1201 = vpop.f32.mrf.mxu0
      %v1202 = vpop.f32.mrf.mxu0
      %v1203 = vadd.f32 %v1107, %v1202
      %v1204 = vpop.f32.mrf.mxu0
      %1205 = vmatprep.mubr.bf16.mxu0 0
      %1206 = vmatmul.mubr.bf16.gmra.mxu0 %v1089
      %v1207 = vpop.f32.mrf.mxu0
      %v1208 = vadd.f32 %v1107, %v1207
      %v1209 = vpop.f32.mrf.mxu0
      %v1210 = vpop.f32.mrf.mxu0
      %v1211 = vadd.f32 %v1107, %v1210
      %v1212 = vpop.f32.mrf.mxu0
      %1213 = vmatprep.mubr.bf16.mxu0 0
      %1214 = vmatmul.mubr.bf16.gmra.mxu0 %v1090
      %v1215 = vpop.f32.mrf.mxu0
      %v1216 = vadd.f32 %v1107, %v1215
      %v1217 = vpop.f32.mrf.mxu0
      %v1218 = vpop.f32.mrf.mxu0
      %v1219 = vadd.f32 %v1107, %v1218
      %v1220 = vpop.f32.mrf.mxu0
      %1221 = vmatprep.mubr.bf16.mxu0 0
      %1222 = vmatmul.mubr.bf16.gmra.mxu0 %v1091
      %v1223 = vpop.f32.mrf.mxu0
      %v1224 = vadd.f32 %v1107, %v1223
      %v1225 = vpop.f32.mrf.mxu0
      %v1226 = vpop.f32.mrf.mxu0
      %v1227 = vadd.f32 %v1107, %v1226
      %v1228 = vpop.f32.mrf.mxu0
      %1229 = vmatprep.mubr.bf16.mxu0 0
      %1230 = vmatmul.mubr.bf16.gmra.mxu0 %v1092
      %v1231 = vpop.f32.mrf.mxu0
      %v1232 = vadd.f32 %v1107, %v1231
      %v1233 = vpop.f32.mrf.mxu0
      %v1234 = vpop.f32.mrf.mxu0
      %v1235 = vadd.f32 %v1107, %v1234
      %v1236 = vpop.f32.mrf.mxu0
      %1237 = vmatprep.mubr.bf16.mxu0 0
      %1238 = vmatmul.mubr.bf16.gmra.mxu0 %v1093
      %v1239 = vpop.f32.mrf.mxu0
      %v1240 = vadd.f32 %v1107, %v1239
      %v1241 = vpop.f32.mrf.mxu0
      %v1242 = vpop.f32.mrf.mxu0
      %v1243 = vadd.f32 %v1107, %v1242
      %v1244 = vpop.f32.mrf.mxu0
      %1245 = vmatprep.mubr.bf16.mxu0 0
      %1246 = vmatmul.mubr.bf16.gmra.mxu0 %v1094
      %v1247 = vpop.f32.mrf.mxu0
      %v1248 = vadd.f32 %v1107, %v1247
      %v1249 = vpop.f32.mrf.mxu0
      %v1250 = vpop.f32.mrf.mxu0
      %v1251 = vadd.f32 %v1107, %v1250
      %v1252 = vpop.f32.mrf.mxu0
      %1253 = vmatprep.mubr.bf16.mxu0 0
      %1254 = vmatmul.mubr.bf16.gmra.mxu0 %v1095
      %v1255 = vpop.f32.mrf.mxu0
      %v1256 = vadd.f32 %v1107, %v1255
      %v1257 = vpop.f32.mrf.mxu0
      %v1258 = vpop.f32.mrf.mxu0
      %v1259 = vadd.f32 %v1107, %v1258
      %v1260 = vpop.f32.mrf.mxu0
      %1261 = vmatprep.mubr.bf16.mxu0 0
      %1262 = vmatmul.mubr.bf16.gmra.mxu0 %v1096
      %v1263 = vpop.f32.mrf.mxu0
      %v1264 = vadd.f32 %v1107, %v1263
      %v1265 = vpop.f32.mrf.mxu0
      %v1266 = vpop.f32.mrf.mxu0
      %v1267 = vadd.f32 %v1107, %v1266
      %v1268 = vpop.f32.mrf.mxu0
      %1269 = vmatprep.mubr.bf16.mxu0 0
      %1270 = vmatmul.mubr.bf16.gmra.mxu0 %v1097
      %v1271 = vpop.f32.mrf.mxu0
      %v1272 = vadd.f32 %v1107, %v1271
      %v1273 = vpop.f32.mrf.mxu0
      %v1274 = vpop.f32.mrf.mxu0
      %v1275 = vadd.f32 %v1107, %v1274
      %v1276 = vpop.f32.mrf.mxu0
      %1277 = vmatprep.mubr.bf16.mxu0 0
      %1278 = vmatmul.mubr.bf16.gmra.mxu0 %v1098
      %v1279 = vpop.f32.mrf.mxu0
      %v1280 = vadd.f32 %v1107, %v1279
      %v1281 = vpop.f32.mrf.mxu0
      %v1282 = vpop.f32.mrf.mxu0
      %v1283 = vadd.f32 %v1107, %v1282
      %v1284 = vpop.f32.mrf.mxu0
      %1285 = vmatprep.mubr.bf16.mxu0 0
      %1286 = vmatmul.mubr.bf16.gmra.mxu0 %v1099
      %v1287 = vpop.f32.mrf.mxu0
      %v1288 = vadd.f32 %v1107, %v1287
      %v1289 = vpop.f32.mrf.mxu0
      %v1290 = vpop.f32.mrf.mxu0
      %v1291 = vadd.f32 %v1107, %v1290
      %v1292 = vpop.f32.mrf.mxu0
      %1293 = vmatprep.mubr.bf16.mxu0 0
      %1294 = vmatmul.mubr.bf16.gmra.mxu0 %v1100
      %v1295 = vpop.f32.mrf.mxu0
      %v1296 = vadd.f32 %v1107, %v1295
      %v1297 = vpop.f32.mrf.mxu0
      %v1298 = vpop.f32.mrf.mxu0
      %v1299 = vadd.f32 %v1107, %v1298
      %v1300 = vpop.f32.mrf.mxu0
      %1301 = vmatprep.mubr.bf16.mxu0 0
      %1302 = vmatmul.mubr.bf16.gmra.mxu0 %v1101
      %v1303 = vpop.f32.mrf.mxu0
      %v1304 = vadd.f32 %v1107, %v1303
      %v1305 = vpop.f32.mrf.mxu0
      %v1306 = vpop.f32.mrf.mxu0
      %v1307 = vadd.f32 %v1107, %v1306
      %v1308 = vpop.f32.mrf.mxu0
      %1309 = vmatprep.mubr.bf16.mxu0 0
      %1310 = vmatmul.mubr.bf16.gmra.mxu0 %v1102
      %v1311 = vpop.f32.mrf.mxu0
      %v1312 = vadd.f32 %v1107, %v1311
      %v1313 = vpop.f32.mrf.mxu0
      %v1314 = vpop.f32.mrf.mxu0
      %v1315 = vadd.f32 %v1107, %v1314
      %v1316 = vpop.f32.mrf.mxu0
      %1317 = vdwg.mxu0
      %v1318 = vmax.f32 %v1192, 0.0
      %v1319 = vmax.f32 %v1195, 0.0
      %v1320 = vmax.f32 %v1200, 0.0
      %v1321 = vmax.f32 %v1203, 0.0
      %v1322 = vmax.f32 %v1208, 0.0
      %v1323 = vmax.f32 %v1211, 0.0
      %v1324 = vmax.f32 %v1216, 0.0
      %v1325 = vmax.f32 %v1219, 0.0
      %v1326 = vmax.f32 %v1224, 0.0
      %v1327 = vmax.f32 %v1227, 0.0
      %v1328 = vmax.f32 %v1232, 0.0
      %v1329 = vmax.f32 %v1235, 0.0
      %v1330 = vmax.f32 %v1240, 0.0
      %v1331 = vmax.f32 %v1243, 0.0
      %v1332 = vmax.f32 %v1248, 0.0
      %v1333 = vmax.f32 %v1251, 0.0
      %v1334 = vmax.f32 %v1256, 0.0
      %v1335 = vmax.f32 %v1259, 0.0
      %v1336 = vmax.f32 %v1264, 0.0
      %v1337 = vmax.f32 %v1267, 0.0
      %v1338 = vmax.f32 %v1272, 0.0
      %v1339 = vmax.f32 %v1275, 0.0
      %v1340 = vmax.f32 %v1280, 0.0
      %v1341 = vmax.f32 %v1283, 0.0
      %v1342 = vmax.f32 %v1288, 0.0
      %v1343 = vmax.f32 %v1291, 0.0
      %v1344 = vmax.f32 %v1296, 0.0
      %v1345 = vmax.f32 %v1299, 0.0
      %v1346 = vmax.f32 %v1304, 0.0
      %v1347 = vmax.f32 %v1307, 0.0
      %v1348 = vmax.f32 %v1312, 0.0
      %v1349 = vmax.f32 %v1315, 0.0
      %v1350 = vadd.f32 %v1318, %v664
      %v1351 = vadd.f32 %v1319, %v667
      %v1352 = vadd.f32 %v1320, %v672
      %v1353 = vadd.f32 %v1321, %v675
      %v1354 = vadd.f32 %v1322, %v680
      %v1355 = vadd.f32 %v1323, %v683
      %v1356 = vadd.f32 %v1324, %v688
      %v1357 = vadd.f32 %v1325, %v691
      %v1358 = vadd.f32 %v1326, %v696
      %v1359 = vadd.f32 %v1327, %v699
      %v1360 = vadd.f32 %v1328, %v704
      %v1361 = vadd.f32 %v1329, %v707
      %v1362 = vadd.f32 %v1330, %v712
      %v1363 = vadd.f32 %v1331, %v715
      %v1364 = vadd.f32 %v1332, %v720
      %v1365 = vadd.f32 %v1333, %v723
      %v1366 = vadd.f32 %v1334, %v728
      %v1367 = vadd.f32 %v1335, %v731
      %v1368 = vadd.f32 %v1336, %v736
      %v1369 = vadd.f32 %v1337, %v739
      %v1370 = vadd.f32 %v1338, %v744
      %v1371 = vadd.f32 %v1339, %v747
      %v1372 = vadd.f32 %v1340, %v752
      %v1373 = vadd.f32 %v1341, %v755
      %v1374 = vadd.f32 %v1342, %v760
      %v1375 = vadd.f32 %v1343, %v763
      %v1376 = vadd.f32 %v1344, %v768
      %v1377 = vadd.f32 %v1345, %v771
      %v1378 = vadd.f32 %v1346, %v776
      %v1379 = vadd.f32 %v1347, %v779
      %v1380 = vadd.f32 %v1348, %v784
      %v1381 = vadd.f32 %v1349, %v787
      %v1382 = vld [vmem:[%s7] sm:$0xf]
      %v1383 = vld [vmem:[%s7 + $0x4] sm:$0xf]
      %v1384 = vld [vmem:[%s7 + $0x8] sm:$0xf]
      %v1385 = vld [vmem:[%s7 + $0xc] sm:$0xf]
      %v1386 = vld [vmem:[%s7 + $0x10] sm:$0xf]
      %v1387 = vld [vmem:[%s7 + $0x14] sm:$0xf]
      %v1388 = vld [vmem:[%s7 + $0x18] sm:$0xf]
      %v1389 = vld [vmem:[%s7 + $0x1c] sm:$0xf]
      %v1390 = vld [vmem:[%s7 + $0x20] sm:$0xf]
      %v1391 = vld [vmem:[%s7 + $0x24] sm:$0xf]
      %v1392 = vld [vmem:[%s7 + $0x28] sm:$0xf]
      %v1393 = vld [vmem:[%s7 + $0x2c] sm:$0xf]
      %v1394 = vld [vmem:[%s7 + $0x30] sm:$0xf]
      %v1395 = vld [vmem:[%s7 + $0x34] sm:$0xf]
      %v1396 = vld [vmem:[%s7 + $0x38] sm:$0xf]
      %v1397 = vld [vmem:[%s7 + $0x3c] sm:$0xf]
      %v1398 = vld [vmem:[%s8] sm:$0x1]
      %v1399 = vld [vmem:[%s9] sm:$0xf]
      %v1400 = vld [vmem:[%s9 + $0x4] sm:$0xf]
      %v1401 = vld [vmem:[%s9 + $0x8] sm:$0xf]
      %v1402 = vld [vmem:[%s9 + $0xc] sm:$0xf]
      %v1403 = vld [vmem:[%s9 + $0x10] sm:$0xf]
      %v1404 = vld [vmem:[%s9 + $0x14] sm:$0xf]
      %v1405 = vld [vmem:[%s9 + $0x18] sm:$0xf]
      %v1406 = vld [vmem:[%s9 + $0x1c] sm:$0xf]
      %v1407 = vld [vmem:[%s9 + $0x20] sm:$0xf]
      %v1408 = vld [vmem:[%s9 + $0x24] sm:$0xf]
      %v1409 = vld [vmem:[%s9 + $0x28] sm:$0xf]
      %v1410 = vld [vmem:[%s9 + $0x2c] sm:$0xf]
      %v1411 = vld [vmem:[%s9 + $0x30] sm:$0xf]
      %v1412 = vld [vmem:[%s9 + $0x34] sm:$0xf]
      %v1413 = vld [vmem:[%s9 + $0x38] sm:$0xf]
      %v1414 = vld [vmem:[%s9 + $0x3c] sm:$0xf]
      %v1415 = vld [vmem:[%s10] sm:$0x1]
      %v1416 = vpack.c.bf16 %v1351, %v1350
      %v1417 = vpack.c.bf16 %v1353, %v1352
      %v1418 = vpack.c.bf16 %v1355, %v1354
      %v1419 = vpack.c.bf16 %v1357, %v1356
      %v1420 = vpack.c.bf16 %v1359, %v1358
      %v1421 = vpack.c.bf16 %v1361, %v1360
      %v1422 = vpack.c.bf16 %v1363, %v1362
      %v1423 = vpack.c.bf16 %v1365, %v1364
      %v1424 = vpack.c.bf16 %v1367, %v1366
      %v1425 = vpack.c.bf16 %v1369, %v1368
      %v1426 = vpack.c.bf16 %v1371, %v1370
      %v1427 = vpack.c.bf16 %v1373, %v1372
      %v1428 = vpack.c.bf16 %v1375, %v1374
      %v1429 = vpack.c.bf16 %v1377, %v1376
      %v1430 = vpack.c.bf16 %v1379, %v1378
      %v1431 = vpack.c.bf16 %v1381, %v1380
      %v1433 = vlaneseq
      %v1434 = vshrl.u32 %v1433, 7
      %v1435 = vsub.s32 0, %v1434
      %v1436 = vrot.slane %v1398, %v1435
      %v1454 = vunpack.c.l.b16 %v1382
      %v1455 = vunpack.c.l.b16 %v1383
      %v1456 = vunpack.c.l.b16 %v1384
      %v1457 = vunpack.c.l.b16 %v1385
      %v1458 = vunpack.c.l.b16 %v1386
      %v1459 = vunpack.c.l.b16 %v1387
      %v1460 = vunpack.c.l.b16 %v1388
      %v1461 = vunpack.c.l.b16 %v1389
      %v1462 = vunpack.c.l.b16 %v1390
      %v1463 = vunpack.c.l.b16 %v1391
      %v1464 = vunpack.c.l.b16 %v1392
      %v1465 = vunpack.c.l.b16 %v1393
      %v1466 = vunpack.c.l.b16 %v1394
      %v1467 = vunpack.c.l.b16 %v1395
      %v1468 = vunpack.c.l.b16 %v1396
      %v1469 = vunpack.c.l.b16 %v1397
      %v1470 = vpack.c.b16 %v1455, %v1454
      %v1471 = vpack.c.b16 %v1457, %v1456
      %v1472 = vpack.c.b16 %v1459, %v1458
      %v1473 = vpack.c.b16 %v1461, %v1460
      %v1474 = vpack.c.b16 %v1463, %v1462
      %v1475 = vpack.c.b16 %v1465, %v1464
      %v1476 = vpack.c.b16 %v1467, %v1466
      %v1477 = vpack.c.b16 %v1469, %v1468
      %1486 = vmatprep.subr.bf16.mxu0 0
      %1487 = vmatpush1.bf16.msra.mxu0 %v1477
      %1488 = vmatprep.subr.bf16.mxu0 0
      %1489 = vmatpush1.bf16.msra.mxu0 %v1476
      %1490 = vmatprep.subr.bf16.mxu0 0
      %1491 = vmatpush1.bf16.msra.mxu0 %v1475
      %1492 = vmatprep.subr.bf16.mxu0 0
      %1493 = vmatpush1.bf16.msra.mxu0 %v1474
      %1494 = vmatprep.subr.bf16.mxu0 0
      %1495 = vmatpush1.bf16.msra.mxu0 %v1473
      %1496 = vmatprep.subr.bf16.mxu0 0
      %1497 = vmatpush1.bf16.msra.mxu0 %v1472
      %1498 = vmatprep.subr.bf16.mxu0 0
      %1499 = vmatpush1.bf16.msra.mxu0 %v1471
      %1500 = vmatprep.subr.bf16.mxu0 0
      %1501 = vmatpush1.bf16.msra.mxu0 %v1470
      %1502 = vmatprep.subr.bf16.mxu0 0
      %1503 = vmatpush2.bf16.msra.mxu0 0
      %1504 = vmatprep.subr.bf16.mxu0 0
      %1505 = vmatpush2.bf16.msra.mxu0 0
      %1506 = vmatprep.subr.bf16.mxu0 0
      %1507 = vmatpush2.bf16.msra.mxu0 0
      %1508 = vmatprep.subr.bf16.mxu0 0
      %1509 = vmatpush2.bf16.msra.mxu0 0
      %1510 = vmatprep.subr.bf16.mxu0 0
      %1511 = vmatpush2.bf16.msra.mxu0 0
      %1512 = vmatprep.subr.bf16.mxu0 0
      %1513 = vmatpush2.bf16.msra.mxu0 0
      %1514 = vmatprep.subr.bf16.mxu0 0
      %1515 = vmatpush2.bf16.msra.mxu0 0
      %1516 = vmatprep.subr.bf16.mxu0 0
      %1517 = vmatpush2.bf16.msra.mxu0 0
      %1518 = vmatprep.mubr.bf16.mxu0 0
      %1519 = vmatmul.mubr.bf16.gmra.mxu0 %v1416
      %v1520 = vpop.f32.mrf.mxu0
      %v1521 = vadd.f32 %v1436, %v1520
      %v1522 = vpop.f32.mrf.mxu0
      %v1523 = vpop.f32.mrf.mxu0
      %v1524 = vadd.f32 %v1436, %v1523
      %v1525 = vpop.f32.mrf.mxu0
      %1526 = vmatprep.mubr.bf16.mxu0 0
      %1527 = vmatmul.mubr.bf16.gmra.mxu0 %v1417
      %v1528 = vpop.f32.mrf.mxu0
      %v1529 = vadd.f32 %v1436, %v1528
      %v1530 = vpop.f32.mrf.mxu0
      %v1531 = vpop.f32.mrf.mxu0
      %v1532 = vadd.f32 %v1436, %v1531
      %v1533 = vpop.f32.mrf.mxu0
      %1534 = vmatprep.mubr.bf16.mxu0 0
      %1535 = vmatmul.mubr.bf16.gmra.mxu0 %v1418
      %v1536 = vpop.f32.mrf.mxu0
      %v1537 = vadd.f32 %v1436, %v1536
      %v1538 = vpop.f32.mrf.mxu0
      %v1539 = vpop.f32.mrf.mxu0
      %v1540 = vadd.f32 %v1436, %v1539
      %v1541 = vpop.f32.mrf.mxu0
      %1542 = vmatprep.mubr.bf16.mxu0 0
      %1543 = vmatmul.mubr.bf16.gmra.mxu0 %v1419
      %v1544 = vpop.f32.mrf.mxu0
      %v1545 = vadd.f32 %v1436, %v1544
      %v1546 = vpop.f32.mrf.mxu0
      %v1547 = vpop.f32.mrf.mxu0
      %v1548 = vadd.f32 %v1436, %v1547
      %v1549 = vpop.f32.mrf.mxu0
      %1550 = vmatprep.mubr.bf16.mxu0 0
      %1551 = vmatmul.mubr.bf16.gmra.mxu0 %v1420
      %v1552 = vpop.f32.mrf.mxu0
      %v1553 = vadd.f32 %v1436, %v1552
      %v1554 = vpop.f32.mrf.mxu0
      %v1555 = vpop.f32.mrf.mxu0
      %v1556 = vadd.f32 %v1436, %v1555
      %v1557 = vpop.f32.mrf.mxu0
      %1558 = vmatprep.mubr.bf16.mxu0 0
      %1559 = vmatmul.mubr.bf16.gmra.mxu0 %v1421
      %v1560 = vpop.f32.mrf.mxu0
      %v1561 = vadd.f32 %v1436, %v1560
      %v1562 = vpop.f32.mrf.mxu0
      %v1563 = vpop.f32.mrf.mxu0
      %v1564 = vadd.f32 %v1436, %v1563
      %v1565 = vpop.f32.mrf.mxu0
      %1566 = vmatprep.mubr.bf16.mxu0 0
      %1567 = vmatmul.mubr.bf16.gmra.mxu0 %v1422
      %v1568 = vpop.f32.mrf.mxu0
      %v1569 = vadd.f32 %v1436, %v1568
      %v1570 = vpop.f32.mrf.mxu0
      %v1571 = vpop.f32.mrf.mxu0
      %v1572 = vadd.f32 %v1436, %v1571
      %v1573 = vpop.f32.mrf.mxu0
      %1574 = vmatprep.mubr.bf16.mxu0 0
      %1575 = vmatmul.mubr.bf16.gmra.mxu0 %v1423
      %v1576 = vpop.f32.mrf.mxu0
      %v1577 = vadd.f32 %v1436, %v1576
      %v1578 = vpop.f32.mrf.mxu0
      %v1579 = vpop.f32.mrf.mxu0
      %v1580 = vadd.f32 %v1436, %v1579
      %v1581 = vpop.f32.mrf.mxu0
      %1582 = vmatprep.mubr.bf16.mxu0 0
      %1583 = vmatmul.mubr.bf16.gmra.mxu0 %v1424
      %v1584 = vpop.f32.mrf.mxu0
      %v1585 = vadd.f32 %v1436, %v1584
      %v1586 = vpop.f32.mrf.mxu0
      %v1587 = vpop.f32.mrf.mxu0
      %v1588 = vadd.f32 %v1436, %v1587
      %v1589 = vpop.f32.mrf.mxu0
      %1590 = vmatprep.mubr.bf16.mxu0 0
      %1591 = vmatmul.mubr.bf16.gmra.mxu0 %v1425
      %v1592 = vpop.f32.mrf.mxu0
      %v1593 = vadd.f32 %v1436, %v1592
      %v1594 = vpop.f32.mrf.mxu0
      %v1595 = vpop.f32.mrf.mxu0
      %v1596 = vadd.f32 %v1436, %v1595
      %v1597 = vpop.f32.mrf.mxu0
      %1598 = vmatprep.mubr.bf16.mxu0 0
      %1599 = vmatmul.mubr.bf16.gmra.mxu0 %v1426
      %v1600 = vpop.f32.mrf.mxu0
      %v1601 = vadd.f32 %v1436, %v1600
      %v1602 = vpop.f32.mrf.mxu0
      %v1603 = vpop.f32.mrf.mxu0
      %v1604 = vadd.f32 %v1436, %v1603
      %v1605 = vpop.f32.mrf.mxu0
      %1606 = vmatprep.mubr.bf16.mxu0 0
      %1607 = vmatmul.mubr.bf16.gmra.mxu0 %v1427
      %v1608 = vpop.f32.mrf.mxu0
      %v1609 = vadd.f32 %v1436, %v1608
      %v1610 = vpop.f32.mrf.mxu0
      %v1611 = vpop.f32.mrf.mxu0
      %v1612 = vadd.f32 %v1436, %v1611
      %v1613 = vpop.f32.mrf.mxu0
      %1614 = vmatprep.mubr.bf16.mxu0 0
      %1615 = vmatmul.mubr.bf16.gmra.mxu0 %v1428
      %v1616 = vpop.f32.mrf.mxu0
      %v1617 = vadd.f32 %v1436, %v1616
      %v1618 = vpop.f32.mrf.mxu0
      %v1619 = vpop.f32.mrf.mxu0
      %v1620 = vadd.f32 %v1436, %v1619
      %v1621 = vpop.f32.mrf.mxu0
      %1622 = vmatprep.mubr.bf16.mxu0 0
      %1623 = vmatmul.mubr.bf16.gmra.mxu0 %v1429
      %v1624 = vpop.f32.mrf.mxu0
      %v1625 = vadd.f32 %v1436, %v1624
      %v1626 = vpop.f32.mrf.mxu0
      %v1627 = vpop.f32.mrf.mxu0
      %v1628 = vadd.f32 %v1436, %v1627
      %v1629 = vpop.f32.mrf.mxu0
      %1630 = vmatprep.mubr.bf16.mxu0 0
      %1631 = vmatmul.mubr.bf16.gmra.mxu0 %v1430
      %v1632 = vpop.f32.mrf.mxu0
      %v1633 = vadd.f32 %v1436, %v1632
      %v1634 = vpop.f32.mrf.mxu0
      %v1635 = vpop.f32.mrf.mxu0
      %v1636 = vadd.f32 %v1436, %v1635
      %v1637 = vpop.f32.mrf.mxu0
      %1638 = vmatprep.mubr.bf16.mxu0 0
      %1639 = vmatmul.mubr.bf16.gmra.mxu0 %v1431
      %v1640 = vpop.f32.mrf.mxu0
      %v1641 = vadd.f32 %v1436, %v1640
      %v1642 = vpop.f32.mrf.mxu0
      %v1643 = vpop.f32.mrf.mxu0
      %v1644 = vadd.f32 %v1436, %v1643
      %v1645 = vpop.f32.mrf.mxu0
      %1646 = vdwg.mxu0
      %v1647 = vmax.f32 %v1521, 0.0
      %v1648 = vmax.f32 %v1524, 0.0
      %v1649 = vmax.f32 %v1529, 0.0
      %v1650 = vmax.f32 %v1532, 0.0
      %v1651 = vmax.f32 %v1537, 0.0
      %v1652 = vmax.f32 %v1540, 0.0
      %v1653 = vmax.f32 %v1545, 0.0
      %v1654 = vmax.f32 %v1548, 0.0
      %v1655 = vmax.f32 %v1553, 0.0
      %v1656 = vmax.f32 %v1556, 0.0
      %v1657 = vmax.f32 %v1561, 0.0
      %v1658 = vmax.f32 %v1564, 0.0
      %v1659 = vmax.f32 %v1569, 0.0
      %v1660 = vmax.f32 %v1572, 0.0
      %v1661 = vmax.f32 %v1577, 0.0
      %v1662 = vmax.f32 %v1580, 0.0
      %v1663 = vmax.f32 %v1585, 0.0
      %v1664 = vmax.f32 %v1588, 0.0
      %v1665 = vmax.f32 %v1593, 0.0
      %v1666 = vmax.f32 %v1596, 0.0
      %v1667 = vmax.f32 %v1601, 0.0
      %v1668 = vmax.f32 %v1604, 0.0
      %v1669 = vmax.f32 %v1609, 0.0
      %v1670 = vmax.f32 %v1612, 0.0
      %v1671 = vmax.f32 %v1617, 0.0
      %v1672 = vmax.f32 %v1620, 0.0
      %v1673 = vmax.f32 %v1625, 0.0
      %v1674 = vmax.f32 %v1628, 0.0
      %v1675 = vmax.f32 %v1633, 0.0
      %v1676 = vmax.f32 %v1636, 0.0
      %v1677 = vmax.f32 %v1641, 0.0
      %v1678 = vmax.f32 %v1644, 0.0
      %v1679 = vpack.c.bf16 %v1648, %v1647
      %v1680 = vpack.c.bf16 %v1650, %v1649
      %v1681 = vpack.c.bf16 %v1652, %v1651
      %v1682 = vpack.c.bf16 %v1654, %v1653
      %v1683 = vpack.c.bf16 %v1656, %v1655
      %v1684 = vpack.c.bf16 %v1658, %v1657
      %v1685 = vpack.c.bf16 %v1660, %v1659
      %v1686 = vpack.c.bf16 %v1662, %v1661
      %v1687 = vpack.c.bf16 %v1664, %v1663
      %v1688 = vpack.c.bf16 %v1666, %v1665
      %v1689 = vpack.c.bf16 %v1668, %v1667
      %v1690 = vpack.c.bf16 %v1670, %v1669
      %v1691 = vpack.c.bf16 %v1672, %v1671
      %v1692 = vpack.c.bf16 %v1674, %v1673
      %v1693 = vpack.c.bf16 %v1676, %v1675
      %v1694 = vpack.c.bf16 %v1678, %v1677
      %v1696 = vlaneseq
      %v1697 = vshrl.u32 %v1696, 7
      %v1698 = vsub.s32 0, %v1697
      %v1699 = vrot.slane %v1415, %v1698
      %v1717 = vunpack.c.l.b16 %v1399
      %v1718 = vunpack.c.l.b16 %v1400
      %v1719 = vunpack.c.l.b16 %v1401
      %v1720 = vunpack.c.l.b16 %v1402
      %v1721 = vunpack.c.l.b16 %v1403
      %v1722 = vunpack.c.l.b16 %v1404
      %v1723 = vunpack.c.l.b16 %v1405
      %v1724 = vunpack.c.l.b16 %v1406
      %v1725 = vunpack.c.l.b16 %v1407
      %v1726 = vunpack.c.l.b16 %v1408
      %v1727 = vunpack.c.l.b16 %v1409
      %v1728 = vunpack.c.l.b16 %v1410
      %v1729 = vunpack.c.l.b16 %v1411
      %v1730 = vunpack.c.l.b16 %v1412
      %v1731 = vunpack.c.l.b16 %v1413
      %v1732 = vunpack.c.l.b16 %v1414
      %v1733 = vpack.c.b16 %v1718, %v1717
      %v1734 = vpack.c.b16 %v1720, %v1719
      %v1735 = vpack.c.b16 %v1722, %v1721
      %v1736 = vpack.c.b16 %v1724, %v1723
      %v1737 = vpack.c.b16 %v1726, %v1725
      %v1738 = vpack.c.b16 %v1728, %v1727
      %v1739 = vpack.c.b16 %v1730, %v1729
      %v1740 = vpack.c.b16 %v1732, %v1731
      %1749 = vmatprep.subr.bf16.mxu0 0
      %1750 = vmatpush1.bf16.msra.mxu0 %v1740
      %1751 = vmatprep.subr.bf16.mxu0 0
      %1752 = vmatpush1.bf16.msra.mxu0 %v1739
      %1753 = vmatprep.subr.bf16.mxu0 0
      %1754 = vmatpush1.bf16.msra.mxu0 %v1738
      %1755 = vmatprep.subr.bf16.mxu0 0
      %1756 = vmatpush1.bf16.msra.mxu0 %v1737
      %1757 = vmatprep.subr.bf16.mxu0 0
      %1758 = vmatpush1.bf16.msra.mxu0 %v1736
      %1759 = vmatprep.subr.bf16.mxu0 0
      %1760 = vmatpush1.bf16.msra.mxu0 %v1735
      %1761 = vmatprep.subr.bf16.mxu0 0
      %1762 = vmatpush1.bf16.msra.mxu0 %v1734
      %1763 = vmatprep.subr.bf16.mxu0 0
      %1764 = vmatpush1.bf16.msra.mxu0 %v1733
      %1765 = vmatprep.subr.bf16.mxu0 0
      %1766 = vmatpush2.bf16.msra.mxu0 0
      %1767 = vmatprep.subr.bf16.mxu0 0
      %1768 = vmatpush2.bf16.msra.mxu0 0
      %1769 = vmatprep.subr.bf16.mxu0 0
      %1770 = vmatpush2.bf16.msra.mxu0 0
      %1771 = vmatprep.subr.bf16.mxu0 0
      %1772 = vmatpush2.bf16.msra.mxu0 0
      %1773 = vmatprep.subr.bf16.mxu0 0
      %1774 = vmatpush2.bf16.msra.mxu0 0
      %1775 = vmatprep.subr.bf16.mxu0 0
      %1776 = vmatpush2.bf16.msra.mxu0 0
      %1777 = vmatprep.subr.bf16.mxu0 0
      %1778 = vmatpush2.bf16.msra.mxu0 0
      %1779 = vmatprep.subr.bf16.mxu0 0
      %1780 = vmatpush2.bf16.msra.mxu0 0
      %1781 = vmatprep.mubr.bf16.mxu0 0
      %1782 = vmatmul.mubr.bf16.gmra.mxu0 %v1679
      %v1783 = vpop.f32.mrf.mxu0
      %v1784 = vadd.f32 %v1699, %v1783
      %v1785 = vpop.f32.mrf.mxu0
      %v1786 = vpop.f32.mrf.mxu0
      %v1787 = vadd.f32 %v1699, %v1786
      %v1788 = vpop.f32.mrf.mxu0
      %1789 = vmatprep.mubr.bf16.mxu0 0
      %1790 = vmatmul.mubr.bf16.gmra.mxu0 %v1680
      %v1791 = vpop.f32.mrf.mxu0
      %v1792 = vadd.f32 %v1699, %v1791
      %v1793 = vpop.f32.mrf.mxu0
      %v1794 = vpop.f32.mrf.mxu0
      %v1795 = vadd.f32 %v1699, %v1794
      %v1796 = vpop.f32.mrf.mxu0
      %1797 = vmatprep.mubr.bf16.mxu0 0
      %1798 = vmatmul.mubr.bf16.gmra.mxu0 %v1681
      %v1799 = vpop.f32.mrf.mxu0
      %v1800 = vadd.f32 %v1699, %v1799
      %v1801 = vpop.f32.mrf.mxu0
      %v1802 = vpop.f32.mrf.mxu0
      %v1803 = vadd.f32 %v1699, %v1802
      %v1804 = vpop.f32.mrf.mxu0
      %1805 = vmatprep.mubr.bf16.mxu0 0
      %1806 = vmatmul.mubr.bf16.gmra.mxu0 %v1682
      %v1807 = vpop.f32.mrf.mxu0
      %v1808 = vadd.f32 %v1699, %v1807
      %v1809 = vpop.f32.mrf.mxu0
      %v1810 = vpop.f32.mrf.mxu0
      %v1811 = vadd.f32 %v1699, %v1810
      %v1812 = vpop.f32.mrf.mxu0
      %1813 = vmatprep.mubr.bf16.mxu0 0
      %1814 = vmatmul.mubr.bf16.gmra.mxu0 %v1683
      %v1815 = vpop.f32.mrf.mxu0
      %v1816 = vadd.f32 %v1699, %v1815
      %v1817 = vpop.f32.mrf.mxu0
      %v1818 = vpop.f32.mrf.mxu0
      %v1819 = vadd.f32 %v1699, %v1818
      %v1820 = vpop.f32.mrf.mxu0
      %1821 = vmatprep.mubr.bf16.mxu0 0
      %1822 = vmatmul.mubr.bf16.gmra.mxu0 %v1684
      %v1823 = vpop.f32.mrf.mxu0
      %v1824 = vadd.f32 %v1699, %v1823
      %v1825 = vpop.f32.mrf.mxu0
      %v1826 = vpop.f32.mrf.mxu0
      %v1827 = vadd.f32 %v1699, %v1826
      %v1828 = vpop.f32.mrf.mxu0
      %1829 = vmatprep.mubr.bf16.mxu0 0
      %1830 = vmatmul.mubr.bf16.gmra.mxu0 %v1685
      %v1831 = vpop.f32.mrf.mxu0
      %v1832 = vadd.f32 %v1699, %v1831
      %v1833 = vpop.f32.mrf.mxu0
      %v1834 = vpop.f32.mrf.mxu0
      %v1835 = vadd.f32 %v1699, %v1834
      %v1836 = vpop.f32.mrf.mxu0
      %1837 = vmatprep.mubr.bf16.mxu0 0
      %1838 = vmatmul.mubr.bf16.gmra.mxu0 %v1686
      %v1839 = vpop.f32.mrf.mxu0
      %v1840 = vadd.f32 %v1699, %v1839
      %v1841 = vpop.f32.mrf.mxu0
      %v1842 = vpop.f32.mrf.mxu0
      %v1843 = vadd.f32 %v1699, %v1842
      %v1844 = vpop.f32.mrf.mxu0
      %1845 = vmatprep.mubr.bf16.mxu0 0
      %1846 = vmatmul.mubr.bf16.gmra.mxu0 %v1687
      %v1847 = vpop.f32.mrf.mxu0
      %v1848 = vadd.f32 %v1699, %v1847
      %v1849 = vpop.f32.mrf.mxu0
      %v1850 = vpop.f32.mrf.mxu0
      %v1851 = vadd.f32 %v1699, %v1850
      %v1852 = vpop.f32.mrf.mxu0
      %1853 = vmatprep.mubr.bf16.mxu0 0
      %1854 = vmatmul.mubr.bf16.gmra.mxu0 %v1688
      %v1855 = vpop.f32.mrf.mxu0
      %v1856 = vadd.f32 %v1699, %v1855
      %v1857 = vpop.f32.mrf.mxu0
      %v1858 = vpop.f32.mrf.mxu0
      %v1859 = vadd.f32 %v1699, %v1858
      %v1860 = vpop.f32.mrf.mxu0
      %1861 = vmatprep.mubr.bf16.mxu0 0
      %1862 = vmatmul.mubr.bf16.gmra.mxu0 %v1689
      %v1863 = vpop.f32.mrf.mxu0
      %v1864 = vadd.f32 %v1699, %v1863
      %v1865 = vpop.f32.mrf.mxu0
      %v1866 = vpop.f32.mrf.mxu0
      %v1867 = vadd.f32 %v1699, %v1866
      %v1868 = vpop.f32.mrf.mxu0
      %1869 = vmatprep.mubr.bf16.mxu0 0
      %1870 = vmatmul.mubr.bf16.gmra.mxu0 %v1690
      %v1871 = vpop.f32.mrf.mxu0
      %v1872 = vadd.f32 %v1699, %v1871
      %v1873 = vpop.f32.mrf.mxu0
      %v1874 = vpop.f32.mrf.mxu0
      %v1875 = vadd.f32 %v1699, %v1874
      %v1876 = vpop.f32.mrf.mxu0
      %1877 = vmatprep.mubr.bf16.mxu0 0
      %1878 = vmatmul.mubr.bf16.gmra.mxu0 %v1691
      %v1879 = vpop.f32.mrf.mxu0
      %v1880 = vadd.f32 %v1699, %v1879
      %v1881 = vpop.f32.mrf.mxu0
      %v1882 = vpop.f32.mrf.mxu0
      %v1883 = vadd.f32 %v1699, %v1882
      %v1884 = vpop.f32.mrf.mxu0
      %1885 = vmatprep.mubr.bf16.mxu0 0
      %1886 = vmatmul.mubr.bf16.gmra.mxu0 %v1692
      %v1887 = vpop.f32.mrf.mxu0
      %v1888 = vadd.f32 %v1699, %v1887
      %v1889 = vpop.f32.mrf.mxu0
      %v1890 = vpop.f32.mrf.mxu0
      %v1891 = vadd.f32 %v1699, %v1890
      %v1892 = vpop.f32.mrf.mxu0
      %1893 = vmatprep.mubr.bf16.mxu0 0
      %1894 = vmatmul.mubr.bf16.gmra.mxu0 %v1693
      %v1895 = vpop.f32.mrf.mxu0
      %v1896 = vadd.f32 %v1699, %v1895
      %v1897 = vpop.f32.mrf.mxu0
      %v1898 = vpop.f32.mrf.mxu0
      %v1899 = vadd.f32 %v1699, %v1898
      %v1900 = vpop.f32.mrf.mxu0
      %1901 = vmatprep.mubr.bf16.mxu0 0
      %1902 = vmatmul.mubr.bf16.gmra.mxu0 %v1694
      %v1903 = vpop.f32.mrf.mxu0
      %v1904 = vadd.f32 %v1699, %v1903
      %v1905 = vpop.f32.mrf.mxu0
      %v1906 = vpop.f32.mrf.mxu0
      %v1907 = vadd.f32 %v1699, %v1906
      %v1908 = vpop.f32.mrf.mxu0
      %1909 = vdwg.mxu0
      %v1910 = vmax.f32 %v1784, 0.0
      %v1911 = vmax.f32 %v1787, 0.0
      %v1912 = vmax.f32 %v1792, 0.0
      %v1913 = vmax.f32 %v1795, 0.0
      %v1914 = vmax.f32 %v1800, 0.0
      %v1915 = vmax.f32 %v1803, 0.0
      %v1916 = vmax.f32 %v1808, 0.0
      %v1917 = vmax.f32 %v1811, 0.0
      %v1918 = vmax.f32 %v1816, 0.0
      %v1919 = vmax.f32 %v1819, 0.0
      %v1920 = vmax.f32 %v1824, 0.0
      %v1921 = vmax.f32 %v1827, 0.0
      %v1922 = vmax.f32 %v1832, 0.0
      %v1923 = vmax.f32 %v1835, 0.0
      %v1924 = vmax.f32 %v1840, 0.0
      %v1925 = vmax.f32 %v1843, 0.0
      %v1926 = vmax.f32 %v1848, 0.0
      %v1927 = vmax.f32 %v1851, 0.0
      %v1928 = vmax.f32 %v1856, 0.0
      %v1929 = vmax.f32 %v1859, 0.0
      %v1930 = vmax.f32 %v1864, 0.0
      %v1931 = vmax.f32 %v1867, 0.0
      %v1932 = vmax.f32 %v1872, 0.0
      %v1933 = vmax.f32 %v1875, 0.0
      %v1934 = vmax.f32 %v1880, 0.0
      %v1935 = vmax.f32 %v1883, 0.0
      %v1936 = vmax.f32 %v1888, 0.0
      %v1937 = vmax.f32 %v1891, 0.0
      %v1938 = vmax.f32 %v1896, 0.0
      %v1939 = vmax.f32 %v1899, 0.0
      %v1940 = vmax.f32 %v1904, 0.0
      %v1941 = vmax.f32 %v1907, 0.0
      %v1942 = vadd.f32 %v1910, %v1350
      %v1943 = vadd.f32 %v1911, %v1351
      %v1944 = vadd.f32 %v1912, %v1352
      %v1945 = vadd.f32 %v1913, %v1353
      %v1946 = vadd.f32 %v1914, %v1354
      %v1947 = vadd.f32 %v1915, %v1355
      %v1948 = vadd.f32 %v1916, %v1356
      %v1949 = vadd.f32 %v1917, %v1357
      %v1950 = vadd.f32 %v1918, %v1358
      %v1951 = vadd.f32 %v1919, %v1359
      %v1952 = vadd.f32 %v1920, %v1360
      %v1953 = vadd.f32 %v1921, %v1361
      %v1954 = vadd.f32 %v1922, %v1362
      %v1955 = vadd.f32 %v1923, %v1363
      %v1956 = vadd.f32 %v1924, %v1364
      %v1957 = vadd.f32 %v1925, %v1365
      %v1958 = vadd.f32 %v1926, %v1366
      %v1959 = vadd.f32 %v1927, %v1367
      %v1960 = vadd.f32 %v1928, %v1368
      %v1961 = vadd.f32 %v1929, %v1369
      %v1962 = vadd.f32 %v1930, %v1370
      %v1963 = vadd.f32 %v1931, %v1371
      %v1964 = vadd.f32 %v1932, %v1372
      %v1965 = vadd.f32 %v1933, %v1373
      %v1966 = vadd.f32 %v1934, %v1374
      %v1967 = vadd.f32 %v1935, %v1375
      %v1968 = vadd.f32 %v1936, %v1376
      %v1969 = vadd.f32 %v1937, %v1377
      %v1970 = vadd.f32 %v1938, %v1378
      %v1971 = vadd.f32 %v1939, %v1379
      %v1972 = vadd.f32 %v1940, %v1380
      %v1973 = vadd.f32 %v1941, %v1381
      %v1974 = vpack.c.bf16 %v1943, %v1942
      %v1975 = vpack.c.bf16 %v1945, %v1944
      %v1976 = vpack.c.bf16 %v1947, %v1946
      %v1977 = vpack.c.bf16 %v1949, %v1948
      %v1978 = vpack.c.bf16 %v1951, %v1950
      %v1979 = vpack.c.bf16 %v1953, %v1952
      %v1980 = vpack.c.bf16 %v1955, %v1954
      %v1981 = vpack.c.bf16 %v1957, %v1956
      %v1982 = vpack.c.bf16 %v1959, %v1958
      %v1983 = vpack.c.bf16 %v1961, %v1960
      %v1984 = vpack.c.bf16 %v1963, %v1962
      %v1985 = vpack.c.bf16 %v1965, %v1964
      %v1986 = vpack.c.bf16 %v1967, %v1966
      %v1987 = vpack.c.bf16 %v1969, %v1968
      %v1988 = vpack.c.bf16 %v1971, %v1970
      %v1989 = vpack.c.bf16 %v1973, %v1972
      %v1990 = vld [vmem:[%s11] sm:$0xf]
      %v1991 = vld [vmem:[%s11 + $0x4] sm:$0xf]
      %v1992 = vld [vmem:[%s11 + $0x8] sm:$0xf]
      %v1993 = vld [vmem:[%s11 + $0xc] sm:$0xf]
      %v1994 = vld [vmem:[%s11 + $0x10] sm:$0xf]
      %v1995 = vld [vmem:[%s11 + $0x14] sm:$0xf]
      %v1996 = vld [vmem:[%s11 + $0x18] sm:$0xf]
      %v1997 = vld [vmem:[%s11 + $0x1c] sm:$0xf]
      %v1998 = vld [vmem:[%s11 + $0x20] sm:$0xf]
      %v1999 = vld [vmem:[%s11 + $0x24] sm:$0xf]
      %v2000 = vld [vmem:[%s11 + $0x28] sm:$0xf]
      %v2001 = vld [vmem:[%s11 + $0x2c] sm:$0xf]
      %v2002 = vld [vmem:[%s11 + $0x30] sm:$0xf]
      %v2003 = vld [vmem:[%s11 + $0x34] sm:$0xf]
      %v2004 = vld [vmem:[%s11 + $0x38] sm:$0xf]
      %v2005 = vld [vmem:[%s11 + $0x3c] sm:$0xf]
      %v2006 = vld [vmem:[%s12] sm:$0x1]
      %v2008 = vlaneseq
      %v2009 = vshrl.u32 %v2008, 7
      %v2010 = vsub.s32 0, %v2009
      %v2011 = vrot.slane %v2006, %v2010
      %v2029 = vunpack.c.l.b16 %v1990
      %v2030 = vunpack.c.l.b16 %v1991
      %v2031 = vunpack.c.l.b16 %v1992
      %v2032 = vunpack.c.l.b16 %v1993
      %v2033 = vunpack.c.l.b16 %v1994
      %v2034 = vunpack.c.l.b16 %v1995
      %v2035 = vunpack.c.l.b16 %v1996
      %v2036 = vunpack.c.l.b16 %v1997
      %v2037 = vunpack.c.l.b16 %v1998
      %v2038 = vunpack.c.l.b16 %v1999
      %v2039 = vunpack.c.l.b16 %v2000
      %v2040 = vunpack.c.l.b16 %v2001
      %v2041 = vunpack.c.l.b16 %v2002
      %v2042 = vunpack.c.l.b16 %v2003
      %v2043 = vunpack.c.l.b16 %v2004
      %v2044 = vunpack.c.l.b16 %v2005
      %v2045 = vpack.c.b16 %v2030, %v2029
      %v2046 = vpack.c.b16 %v2032, %v2031
      %v2047 = vpack.c.b16 %v2034, %v2033
      %v2048 = vpack.c.b16 %v2036, %v2035
      %v2049 = vpack.c.b16 %v2038, %v2037
      %v2050 = vpack.c.b16 %v2040, %v2039
      %v2051 = vpack.c.b16 %v2042, %v2041
      %v2052 = vpack.c.b16 %v2044, %v2043
      %2061 = vmatprep.subr.bf16.mxu0 0
      %2062 = vmatpush1.bf16.msra.mxu0 %v2052
      %2063 = vmatprep.subr.bf16.mxu0 0
      %2064 = vmatpush1.bf16.msra.mxu0 %v2051
      %2065 = vmatprep.subr.bf16.mxu0 0
      %2066 = vmatpush1.bf16.msra.mxu0 %v2050
      %2067 = vmatprep.subr.bf16.mxu0 0
      %2068 = vmatpush1.bf16.msra.mxu0 %v2049
      %2069 = vmatprep.subr.bf16.mxu0 0
      %2070 = vmatpush1.bf16.msra.mxu0 %v2048
      %2071 = vmatprep.subr.bf16.mxu0 0
      %2072 = vmatpush1.bf16.msra.mxu0 %v2047
      %2073 = vmatprep.subr.bf16.mxu0 0
      %2074 = vmatpush1.bf16.msra.mxu0 %v2046
      %2075 = vmatprep.subr.bf16.mxu0 0
      %2076 = vmatpush1.bf16.msra.mxu0 %v2045
      %2077 = vmatprep.subr.bf16.mxu0 0
      %2078 = vmatpush2.bf16.msra.mxu0 0
      %2079 = vmatprep.subr.bf16.mxu0 0
      %2080 = vmatpush2.bf16.msra.mxu0 0
      %2081 = vmatprep.subr.bf16.mxu0 0
      %2082 = vmatpush2.bf16.msra.mxu0 0
      %2083 = vmatprep.subr.bf16.mxu0 0
      %2084 = vmatpush2.bf16.msra.mxu0 0
      %2085 = vmatprep.subr.bf16.mxu0 0
      %2086 = vmatpush2.bf16.msra.mxu0 0
      %2087 = vmatprep.subr.bf16.mxu0 0
      %2088 = vmatpush2.bf16.msra.mxu0 0
      %2089 = vmatprep.subr.bf16.mxu0 0
      %2090 = vmatpush2.bf16.msra.mxu0 0
      %2091 = vmatprep.subr.bf16.mxu0 0
      %2092 = vmatpush2.bf16.msra.mxu0 0
      %2093 = vmatprep.mubr.bf16.mxu0 0
      %2094 = vmatmul.mubr.bf16.gmra.mxu0 %v1974
      %v2095 = vpop.f32.mrf.mxu0
      %v2096 = vadd.f32 %v2011, %v2095
      %v2097 = vpop.f32.mrf.mxu0
      %v2098 = vpop.f32.mrf.mxu0
      %v2099 = vadd.f32 %v2011, %v2098
      %v2100 = vpop.f32.mrf.mxu0
      %2101 = vmatprep.mubr.bf16.mxu0 0
      %2102 = vmatmul.mubr.bf16.gmra.mxu0 %v1975
      %v2103 = vpop.f32.mrf.mxu0
      %v2104 = vadd.f32 %v2011, %v2103
      %v2105 = vpop.f32.mrf.mxu0
      %v2106 = vpop.f32.mrf.mxu0
      %v2107 = vadd.f32 %v2011, %v2106
      %v2108 = vpop.f32.mrf.mxu0
      %2109 = vmatprep.mubr.bf16.mxu0 0
      %2110 = vmatmul.mubr.bf16.gmra.mxu0 %v1976
      %v2111 = vpop.f32.mrf.mxu0
      %v2112 = vadd.f32 %v2011, %v2111
      %v2113 = vpop.f32.mrf.mxu0
      %v2114 = vpop.f32.mrf.mxu0
      %v2115 = vadd.f32 %v2011, %v2114
      %v2116 = vpop.f32.mrf.mxu0
      %2117 = vmatprep.mubr.bf16.mxu0 0
      %2118 = vmatmul.mubr.bf16.gmra.mxu0 %v1977
      %v2119 = vpop.f32.mrf.mxu0
      %v2120 = vadd.f32 %v2011, %v2119
      %v2121 = vpop.f32.mrf.mxu0
      %v2122 = vpop.f32.mrf.mxu0
      %v2123 = vadd.f32 %v2011, %v2122
      %v2124 = vpop.f32.mrf.mxu0
      %2125 = vmatprep.mubr.bf16.mxu0 0
      %2126 = vmatmul.mubr.bf16.gmra.mxu0 %v1978
      %v2127 = vpop.f32.mrf.mxu0
      %v2128 = vadd.f32 %v2011, %v2127
      %v2129 = vpop.f32.mrf.mxu0
      %v2130 = vpop.f32.mrf.mxu0
      %v2131 = vadd.f32 %v2011, %v2130
      %v2132 = vpop.f32.mrf.mxu0
      %2133 = vmatprep.mubr.bf16.mxu0 0
      %2134 = vmatmul.mubr.bf16.gmra.mxu0 %v1979
      %v2135 = vpop.f32.mrf.mxu0
      %v2136 = vadd.f32 %v2011, %v2135
      %v2137 = vpop.f32.mrf.mxu0
      %v2138 = vpop.f32.mrf.mxu0
      %v2139 = vadd.f32 %v2011, %v2138
      %v2140 = vpop.f32.mrf.mxu0
      %2141 = vmatprep.mubr.bf16.mxu0 0
      %2142 = vmatmul.mubr.bf16.gmra.mxu0 %v1980
      %v2143 = vpop.f32.mrf.mxu0
      %v2144 = vadd.f32 %v2011, %v2143
      %v2145 = vpop.f32.mrf.mxu0
      %v2146 = vpop.f32.mrf.mxu0
      %v2147 = vadd.f32 %v2011, %v2146
      %v2148 = vpop.f32.mrf.mxu0
      %2149 = vmatprep.mubr.bf16.mxu0 0
      %2150 = vmatmul.mubr.bf16.gmra.mxu0 %v1981
      %v2151 = vpop.f32.mrf.mxu0
      %v2152 = vadd.f32 %v2011, %v2151
      %v2153 = vpop.f32.mrf.mxu0
      %v2154 = vpop.f32.mrf.mxu0
      %v2155 = vadd.f32 %v2011, %v2154
      %v2156 = vpop.f32.mrf.mxu0
      %2157 = vmatprep.mubr.bf16.mxu0 0
      %2158 = vmatmul.mubr.bf16.gmra.mxu0 %v1982
      %v2159 = vpop.f32.mrf.mxu0
      %v2160 = vadd.f32 %v2011, %v2159
      %v2161 = vpop.f32.mrf.mxu0
      %v2162 = vpop.f32.mrf.mxu0
      %v2163 = vadd.f32 %v2011, %v2162
      %v2164 = vpop.f32.mrf.mxu0
      %2165 = vmatprep.mubr.bf16.mxu0 0
      %2166 = vmatmul.mubr.bf16.gmra.mxu0 %v1983
      %v2167 = vpop.f32.mrf.mxu0
      %v2168 = vadd.f32 %v2011, %v2167
      %v2169 = vpop.f32.mrf.mxu0
      %v2170 = vpop.f32.mrf.mxu0
      %v2171 = vadd.f32 %v2011, %v2170
      %v2172 = vpop.f32.mrf.mxu0
      %2173 = vmatprep.mubr.bf16.mxu0 0
      %2174 = vmatmul.mubr.bf16.gmra.mxu0 %v1984
      %v2175 = vpop.f32.mrf.mxu0
      %v2176 = vadd.f32 %v2011, %v2175
      %v2177 = vpop.f32.mrf.mxu0
      %v2178 = vpop.f32.mrf.mxu0
      %v2179 = vadd.f32 %v2011, %v2178
      %v2180 = vpop.f32.mrf.mxu0
      %2181 = vmatprep.mubr.bf16.mxu0 0
      %2182 = vmatmul.mubr.bf16.gmra.mxu0 %v1985
      %v2183 = vpop.f32.mrf.mxu0
      %v2184 = vadd.f32 %v2011, %v2183
      %v2185 = vpop.f32.mrf.mxu0
      %v2186 = vpop.f32.mrf.mxu0
      %v2187 = vadd.f32 %v2011, %v2186
      %v2188 = vpop.f32.mrf.mxu0
      %2189 = vmatprep.mubr.bf16.mxu0 0
      %2190 = vmatmul.mubr.bf16.gmra.mxu0 %v1986
      %v2191 = vpop.f32.mrf.mxu0
      %v2192 = vadd.f32 %v2011, %v2191
      %v2193 = vpop.f32.mrf.mxu0
      %v2194 = vpop.f32.mrf.mxu0
      %v2195 = vadd.f32 %v2011, %v2194
      %v2196 = vpop.f32.mrf.mxu0
      %2197 = vmatprep.mubr.bf16.mxu0 0
      %2198 = vmatmul.mubr.bf16.gmra.mxu0 %v1987
      %v2199 = vpop.f32.mrf.mxu0
      %v2200 = vadd.f32 %v2011, %v2199
      %v2201 = vpop.f32.mrf.mxu0
      %v2202 = vpop.f32.mrf.mxu0
      %v2203 = vadd.f32 %v2011, %v2202
      %v2204 = vpop.f32.mrf.mxu0
      %2205 = vmatprep.mubr.bf16.mxu0 0
      %2206 = vmatmul.mubr.bf16.gmra.mxu0 %v1988
      %v2207 = vpop.f32.mrf.mxu0
      %v2208 = vadd.f32 %v2011, %v2207
      %v2209 = vpop.f32.mrf.mxu0
      %v2210 = vpop.f32.mrf.mxu0
      %v2211 = vadd.f32 %v2011, %v2210
      %v2212 = vpop.f32.mrf.mxu0
      %2213 = vmatprep.mubr.bf16.mxu0 0
      %2214 = vmatmul.mubr.bf16.gmra.mxu0 %v1989
      %v2215 = vpop.f32.mrf.mxu0
      %v2216 = vadd.f32 %v2011, %v2215
      %v2217 = vpop.f32.mrf.mxu0
      %v2218 = vpop.f32.mrf.mxu0
      %v2219 = vadd.f32 %v2011, %v2218
      %v2220 = vpop.f32.mrf.mxu0
      %2221 = vdwg.mxu0
      %vm2222 = vcmask 523264
      %2223 = vst.msk [vmem:[%s442] sm:$0xff] %vm2222, %v2096
      %2224 = vst.msk [vmem:[%s442 + $0x8] sm:$0xff] %vm2222, %v2099
      %2225 = vst.msk [vmem:[%s442 + $0x10] sm:$0xff] %vm2222, %v2104
      %2226 = vst.msk [vmem:[%s442 + $0x18] sm:$0xff] %vm2222, %v2107
      %2227 = vst.msk [vmem:[%s442 + $0x20] sm:$0xff] %vm2222, %v2112
      %2228 = vst.msk [vmem:[%s442 + $0x28] sm:$0xff] %vm2222, %v2115
      %2229 = vst.msk [vmem:[%s442 + $0x30] sm:$0xff] %vm2222, %v2120
      %2230 = vst.msk [vmem:[%s442 + $0x38] sm:$0xff] %vm2222, %v2123
      %2231 = vst.msk [vmem:[%s442 + $0x40] sm:$0xff] %vm2222, %v2128
      %2232 = vst.msk [vmem:[%s442 + $0x48] sm:$0xff] %vm2222, %v2131
      %2233 = vst.msk [vmem:[%s442 + $0x50] sm:$0xff] %vm2222, %v2136
      %2234 = vst.msk [vmem:[%s442 + $0x58] sm:$0xff] %vm2222, %v2139
      %2235 = vst.msk [vmem:[%s442 + $0x60] sm:$0xff] %vm2222, %v2144
      %2236 = vst.msk [vmem:[%s442 + $0x68] sm:$0xff] %vm2222, %v2147
      %2237 = vst.msk [vmem:[%s442 + $0x70] sm:$0xff] %vm2222, %v2152
      %2238 = vst.msk [vmem:[%s442 + $0x78] sm:$0xff] %vm2222, %v2155
      %2239 = vst.msk [vmem:[%s442 + $0x80] sm:$0xff] %vm2222, %v2160
      %2240 = vst.msk [vmem:[%s442 + $0x88] sm:$0xff] %vm2222, %v2163
      %2241 = vst.msk [vmem:[%s442 + $0x90] sm:$0xff] %vm2222, %v2168
      %2242 = vst.msk [vmem:[%s442 + $0x98] sm:$0xff] %vm2222, %v2171
      %2243 = vst.msk [vmem:[%s442 + $0xa0] sm:$0xff] %vm2222, %v2176
      %2244 = vst.msk [vmem:[%s442 + $0xa8] sm:$0xff] %vm2222, %v2179
      %2245 = vst.msk [vmem:[%s442 + $0xb0] sm:$0xff] %vm2222, %v2184
      %2246 = vst.msk [vmem:[%s442 + $0xb8] sm:$0xff] %vm2222, %v2187
      %2247 = vst.msk [vmem:[%s442 + $0xc0] sm:$0xff] %vm2222, %v2192
      %2248 = vst.msk [vmem:[%s442 + $0xc8] sm:$0xff] %vm2222, %v2195
      %2249 = vst.msk [vmem:[%s442 + $0xd0] sm:$0xff] %vm2222, %v2200
      %2250 = vst.msk [vmem:[%s442 + $0xd8] sm:$0xff] %vm2222, %v2203
      %2251 = vst.msk [vmem:[%s442 + $0xe0] sm:$0xff] %vm2222, %v2208
      %2252 = vst.msk [vmem:[%s442 + $0xe8] sm:$0xff] %vm2222, %v2211
      %2253 = vst.msk [vmem:[%s442 + $0xf0] sm:$0xff] %vm2222, %v2216
      %2254 = vst.msk [vmem:[%s442 + $0xf8] sm:$0xff] %vm2222, %v2219
      %s2255 = smul.u32 32, %s24
      %p2256 = scmp.lt.s32.totalorder %s2255, 127
      %s2257 = scalar_select %p2256, %s2255, 127
      %s2258 = smul.addr %s2257, 8
      %s2259 = scalar_lea.vmem %s13, %s2258
      // Predicated region
      $region73: #{tpu_custom_call.1} parent=71 // pred_check
        %p2260 = pneg %p320
      $region74: #{tpu_custom_call.1} parent=71 // pred_check_branch
        %2262 = sbr.rel (%p2260) target = $region76
      $region75: #{tpu_custom_call.1} parent=71 // pred_region
        %s2263 = smul.u32 32, %s24
      $region76: #{tpu_custom_call.1} parent=71 // pred_fallthru
        _
    $region72: #{tpu_custom_call.1} parent=5 // pred_fallthru
      _
    %p2264 = scmp.le.s32.totalorder 2, %s19
    // Predicated region
    $region77: #{tpu_custom_call.1} parent=5 // pred_check
      %p2265 = pneg %p2264
    $region78: #{tpu_custom_call.1} parent=5 // pred_check_branch
      %2267 = sbr.rel (%p2265) target = $region80
    $region79: #{tpu_custom_call.1} parent=5 // pred_region
      %s2268 = ssub.s32 %s19, 2
      // Predicated region
      $region81: #{tpu_custom_call.1} parent=79 // pred_check
        %p2269 = pneg %p326
      $region82: #{tpu_custom_call.1} parent=79 // pred_check_branch
        %2271 = sbr.rel (%p2269) target = $region84
      $region83: #{tpu_custom_call.1} parent=79 // pred_region
        %s2272 = smul.u32 32, %s25
        %p2273 = scmp.lt.s32.totalorder %s2272, 127
        %s2274 = scalar_select %p2273, %s2272, 127
        %s2275 = smul.addr %s2274, 8
        %s2276 = scalar_lea.vmem %s13, %s2275
      $region84: #{tpu_custom_call.1} parent=79 // pred_fallthru
        _
    $region80: #{tpu_custom_call.1} parent=5 // pred_fallthru
      _
  $region6: #{tpu_custom_call.1} parent=0 // loop_footer
    %s23 = sadd.s32 1, %s19
  $region7: #{tpu_custom_call.1} parent=0 // loop_footer_branch
    %18 = sbr.rel target = $region3
  $region8: #{tpu_custom_call.1} parent=0 // loop_exit
    _

</llo_original>
